<compile_context>
chip_gen: v6e
topology: v6e:2x2x1
jax: 0.10.0
libtpu: 0.0.40
codegen_flags: <defaults>
</compile_context>

<pallas_src>
from functools import partial

import jax
import jax.numpy as jnp
from jax import lax
from jax.experimental import pallas as pl
from jax.experimental.pallas import tpu as pltpu


def _round_up(x, m):
    return (x + m - 1) // m * m


# ----------------------------- Pallas kernel ------------------------------ #
def lstm_regressor_kernel(x_ref, wih_ref, whh_ref, b_ref, wreg_ref, breg_ref,
                          out_ref, gx_ref, seq_ref, *,
                          num_layers, seq_len, hidden_p, unroll):
    """One grid step = one (batch_tile, layer) pair.

    x_ref    : (T, TB, Hp)    bf16 input, features zero-padded to Hp
    wih_ref  : (1, Hp, 4Hp)   bf16 W_ih^T of the current layer (gate slots Hp wide)
    whh_ref  : (1, Hp, 4Hp)   bf16 W_hh^T of the current layer
    b_ref    : (1, 1, 4Hp)    f32 b_ih + b_hh
    wreg_ref : (1, Hp)        f32 regressor weight (row)
    breg_ref : (1, 1)         f32 regressor bias
    out_ref  : (TB, 1)        f32
    gx_ref   : (T, TB, 4Hp)   f32 scratch: hoisted input projection
    seq_ref  : (T, TB, Hp)    bf16 scratch: layer-to-layer sequence buffer
    """
    layer = pl.program_id(1)
    T = seq_len
    Hp = hidden_p
    TB = x_ref.shape[1]

    # First layer of this batch tile: load the input sequence.
    @pl.when(layer == 0)
    def _():
        seq_ref[...] = x_ref[...]

    wih = wih_ref[0]                       # (Hp, 4Hp) bf16
    whh = whh_ref[0]                       # (Hp, 4Hp) bf16
    b = b_ref[0]                           # (1, 4Hp)  f32

    # Hoisted input projection: one big MXU call for the whole sequence.
    inp = seq_ref[...].reshape(T * TB, Hp)                       # bf16
    gx = jnp.dot(inp, wih, preferred_element_type=jnp.float32)   # (T*TB, 4Hp)
    gx_ref[...] = gx.reshape(T, TB, 4 * Hp)

    def step(t, carry):
        h, c = carry                                             # f32 (TB, Hp)
        gates = (gx_ref[t]
                 + jnp.dot(h.astype(jnp.bfloat16), whh,
                           preferred_element_type=jnp.float32)
                 + b)                                            # (TB, 4Hp)
        # Gate slots are Hp (multiple of 128) wide -> lane-aligned slices.
        i = jax.nn.sigmoid(gates[:, 0 * Hp:1 * Hp])
        f = jax.nn.sigmoid(gates[:, 1 * Hp:2 * Hp])
        g = jnp.tanh(gates[:, 2 * Hp:3 * Hp])
        o = jax.nn.sigmoid(gates[:, 3 * Hp:4 * Hp])
        c = f * c + i * g
        h = o * jnp.tanh(c)
        seq_ref[t] = h.astype(jnp.bfloat16)   # next layer's input sequence
        return h, c

    h0 = jnp.zeros((TB, Hp), jnp.float32)
    c0 = jnp.zeros((TB, Hp), jnp.float32)
    h, _ = lax.fori_loop(0, T, step, (h0, c0), unroll=unroll)

    # TODO(synk): nn.LSTM applies inter-layer dropout only in train mode;
    # eval/inference semantics implemented here, so dropout is a no-op.

    # Last layer: regressor on hidden[-1] as VPU mul + lane reduction.
    @pl.when(layer == num_layers - 1)
    def _():
        out_ref[...] = (jnp.sum(h * wreg_ref[...], axis=-1, keepdims=True)
                        + breg_ref[...]).astype(out_ref.dtype)


# ------------------------------ JAX wrapper -------------------------------- #
def lstm_regressor_forward(x, params, *, hidden_size, num_layers):
    B, T, F = x.shape
    H = hidden_size
    Hp = _round_up(H, 128)               # lane-aligned gate slots
    assert F <= Hp, "kernel pads the input feature dim up to round_up(H, 128)"

    TB = min(_round_up(B, 8), 128)       # batch tile (sublane-aligned)
    Bp = _round_up(B, TB)

    # ---- pack weights: (L, Hp, 4Hp), gate-g columns live in [g*Hp, g*Hp+H) ---
    wih_l, whh_l, b_l = [], [], []
    for l in range(num_layers):
        w_ih = params[f"weight_ih_l{l}"].astype(jnp.float32)          # (4H, in)
        w_hh = params[f"weight_hh_l{l}"].astype(jnp.float32)          # (4H, H)
        bias = (params[f"bias_ih_l{l}"]
                + params[f"bias_hh_l{l}"]).astype(jnp.float32)        # (4H,)
        in_dim = w_ih.shape[1]
        wt_ih, wt_hh = w_ih.T, w_hh.T                                 # (in,4H),(H,4H)
        wih = jnp.zeros((Hp, 4 * Hp), jnp.float32)
        whh = jnp.zeros((Hp, 4 * Hp), jnp.float32)
        bb = jnp.zeros((1, 4 * Hp), jnp.float32)
        for g in range(4):
            wih = wih.at[:in_dim, g * Hp:g * Hp + H].set(wt_ih[:, g * H:(g + 1) * H])
            whh = whh.at[:H, g * Hp:g * Hp + H].set(wt_hh[:, g * H:(g + 1) * H])
            bb = bb.at[0, g * Hp:g * Hp + H].set(bias[g * H:(g + 1) * H])
        wih_l.append(wih), whh_l.append(whh), b_l.append(bb)
    wih_t = jnp.stack(wih_l).astype(jnp.bfloat16)        # (L, Hp, 4Hp)
    whh_t = jnp.stack(whh_l).astype(jnp.bfloat16)        # (L, Hp, 4Hp)
    b = jnp.stack(b_l)                                   # (L, 1, 4Hp) f32

    wreg = jnp.zeros((1, Hp), jnp.float32).at[0, :H].set(
        params["reg_w"].reshape(-1).astype(jnp.float32))
    breg = params["reg_b"].reshape(1, 1).astype(jnp.float32)

    # ---- input: (B,T,F) -> (T, Bp, Hp) bf16, zero-padded -------------------
    xt = jnp.transpose(x.astype(jnp.float32), (1, 0, 2))       # (T, B, F)
    xt = jnp.pad(xt, ((0, 0), (0, Bp - B), (0, Hp - F))).astype(jnp.bfloat16)

    # ---- VMEM budget (explicit limit, with headroom) ------------------------
    vmem_bytes = (
        2 * 2 * (Hp * 4 * Hp * 2)        # wih + whh, double-buffered, bf16
        + 2 * (4 * Hp * 4)               # bias (f32, double-buffered)
        + 2 * (T * TB * Hp * 2)          # x tile (bf16, double-buffered)
        + T * TB * 4 * Hp * 4            # gates scratch (f32)
        + T * TB * Hp * 2                # sequence scratch (bf16)
        + 4 * (Hp + 1 + TB) * 4          # wreg / breg / out (padded, small)
    )
    vmem_limit = int(min(max(2 * vmem_bytes + (4 << 20), 16 << 20), 96 << 20))

    kernel = partial(lstm_regressor_kernel, num_layers=num_layers,
                     seq_len=T, hidden_p=Hp, unroll=bool(T <= 16))

    out = pl.pallas_call(
        kernel,
        out_shape=jax.ShapeDtypeStruct((Bp, 1), jnp.float32),
        grid_spec=pltpu.PrefetchScalarGridSpec(
            num_scalar_prefetch=0,
            grid=(Bp // TB, num_layers),
            in_specs=[
                pl.BlockSpec((T, TB, Hp), lambda bi, l: (0, bi, 0)),      # x
                pl.BlockSpec((1, Hp, 4 * Hp), lambda bi, l: (l, 0, 0)),   # W_ih^T
                pl.BlockSpec((1, Hp, 4 * Hp), lambda bi, l: (l, 0, 0)),   # W_hh^T
                pl.BlockSpec((1, 1, 4 * Hp), lambda bi, l: (l, 0, 0)),    # bias
                pl.BlockSpec((1, Hp), lambda bi, l: (0, 0)),              # reg w
                pl.BlockSpec((1, 1), lambda bi, l: (0, 0)),               # reg b
            ],
            out_specs=pl.BlockSpec((TB, 1), lambda bi, l: (bi, 0)),
            scratch_shapes=[
                pltpu.VMEM((T, TB, 4 * Hp), jnp.float32),   # hoisted x-projection
                pltpu.VMEM((T, TB, Hp), jnp.bfloat16),      # layer sequence buffer
            ]),
        compiler_params=pltpu.CompilerParams(
            dimension_semantics=("parallel", "arbitrary"),
            vmem_limit_bytes=vmem_limit),
    )(xt, wih_t, whh_t, b, wreg, breg)
    return out[:B]


# --------------------------- Pure-JAX reference ---------------------------- #
def reference_forward(x, params, *, hidden_size, num_layers):
    B, T, F = x.shape
    H = hidden_size
    seq_in = x.astype(jnp.float32)
    h = jnp.zeros((B, H), jnp.float32)
    for l in range(num_layers):
        w_ih = params[f"weight_ih_l{l}"]
        w_hh = params[f"weight_hh_l{l}"]
        bias = params[f"bias_ih_l{l}"] + params[f"bias_hh_l{l}"]
        h = jnp.zeros((B, H), jnp.float32)
        c = jnp.zeros((B, H), jnp.float32)
        outs = []
        for t in range(T):
            gates = seq_in[:, t, :] @ w_ih.T + h @ w_hh.T + bias
            i = jax.nn.sigmoid(gates[:, 0 * H:1 * H])
            f = jax.nn.sigmoid(gates[:, 1 * H:2 * H])
            g = jnp.tanh(gates[:, 2 * H:3 * H])
            o = jax.nn.sigmoid(gates[:, 3 * H:4 * H])
            c = f * c + i * g
            h = o * jnp.tanh(c)
            outs.append(h)
        seq_in = jnp.stack(outs, axis=1)
    return h @ params["reg_w"].T + params["reg_b"]


# --------------------------------- main ------------------------------------ #
def init_params(key, *, n_features, hidden_size, num_layers):
    k = 1.0 / jnp.sqrt(hidden_size)
    params = {}
    for l in range(num_layers):
        in_dim = n_features if l == 0 else hidden_size
        key, k1, k2, k3, k4 = jax.random.split(key, 5)
        params[f"weight_ih_l{l}"] = jax.random.uniform(
            k1, (4 * hidden_size, in_dim), jnp.float32, -k, k)
        params[f"weight_hh_l{l}"] = jax.random.uniform(
            k2, (4 * hidden_size, hidden_size), jnp.float32, -k, k)
        params[f"bias_ih_l{l}"] = jax.random.uniform(
            k3, (4 * hidden_size,), jnp.float32, -k, k)
        params[f"bias_hh_l{l}"] = jax.random.uniform(
            k4, (4 * hidden_size,), jnp.float32, -k, k)
    key, k1, k2 = jax.random.split(key, 3)
    params["reg_w"] = jax.random.uniform(k1, (1, hidden_size), jnp.float32, -k, k)
    params["reg_b"] = jax.random.uniform(k2, (1,), jnp.float32, -k, k)
    return params


if __name__ == "__main__":
    batch, seq_len, n_features = 2, 8, 4
    hidden_size, num_layers = 32, 2

    key = jax.random.PRNGKey(0)
    key, xkey, pkey = jax.random.split(key, 3)
    x = jax.random.normal(xkey, (batch, seq_len, n_features), jnp.float32)
    params = init_params(pkey, n_features=n_features,
                         hidden_size=hidden_size, num_layers=num_layers)

    out = lstm_regressor_forward(x, params,
                                 hidden_size=hidden_size, num_layers=num_layers)
    out = jax.block_until_ready(out)

    ref = reference_forward(x, params,
                            hidden_size=hidden_size, num_layers=num_layers)
    assert out.shape == (batch, 1)
    # bf16 MXU inputs (f32 accumulation/state) -> looser tolerance than pure f32.
    assert jnp.allclose(out, ref, atol=3e-2, rtol=3e-2), (out, ref)
    print("KERNEL_OK")
</pallas_src>

<mosaic_0001>
module attributes {stable_mosaic.version = 11 : i64} {
  func.func @lstm_regressor_kernel(%arg0: i32, %arg1: i32, %arg2: memref<8x8x128xbf16, #tpu.memory_space<vmem>>, %arg3: memref<1x128x512xbf16, #tpu.memory_space<vmem>>, %arg4: memref<1x128x512xbf16, #tpu.memory_space<vmem>>, %arg5: memref<1x1x512xf32, #tpu.memory_space<vmem>>, %arg6: memref<1x128xf32, #tpu.memory_space<vmem>>, %arg7: memref<1x1xf32, #tpu.memory_space<vmem>>, %arg8: memref<8x1xf32, #tpu.memory_space<vmem>>, %arg9: memref<8x8x512xf32, #tpu.memory_space<vmem>>, %arg10: memref<8x8x128xbf16, #tpu.memory_space<vmem>>) attributes {dimension_semantics = [#tpu.dimension_semantics<parallel>, #tpu.dimension_semantics<arbitrary>], iteration_bounds = array<i64: 1, 2>, scalar_prefetch = 0 : i64, scratch_operands = 2 : i64, tpu.core_type = #tpu.core_type<tc>, window_params = [{transform_indices = @transform_0, window_bounds = array<i64: 8, 8, 128>}, {transform_indices = @transform_1, window_bounds = array<i64: 1, 128, 512>}, {transform_indices = @transform_2, window_bounds = array<i64: 1, 128, 512>}, {transform_indices = @transform_3, window_bounds = array<i64: 1, 1, 512>}, {pipeline_mode = #tpu.pipeline_mode<synchronous>, transform_indices = @transform_4, window_bounds = array<i64: 1, 128>}, {pipeline_mode = #tpu.pipeline_mode<synchronous>, transform_indices = @transform_5, window_bounds = array<i64: 1, 1>}, {transform_indices = @transform_6, window_bounds = array<i64: 8, 1>}]} {
    %c0_i32 = arith.constant 0 : i32
    %0 = arith.cmpi eq, %arg1, %c0_i32 : i32
    %1 = arith.extui %0 : i1 to i32
    %c0_i32_0 = arith.constant 0 : i32
    %2 = arith.cmpi ne, %1, %c0_i32_0 : i32
    scf.if %2 {
      %c0_84 = arith.constant 0 : index
      %c0_85 = arith.constant 0 : index
      %c0_86 = arith.constant 0 : index
      %323 = vector.load %arg2[%c0_84, %c0_85, %c0_86] : memref<8x8x128xbf16, #tpu.memory_space<vmem>>, vector<8x8x128xbf16>
      %c0_87 = arith.constant 0 : index
      %c0_88 = arith.constant 0 : index
      %c0_89 = arith.constant 0 : index
      %324 = vector.load %arg10[%c0_87, %c0_88, %c0_89] : memref<8x8x128xbf16, #tpu.memory_space<vmem>>, vector<8x8x128xbf16>
      tpu.vector_store %arg10[%c0_87, %c0_88, %c0_89], %323 {strides = array<i32>} : memref<8x8x128xbf16, #tpu.memory_space<vmem>>, vector<8x8x128xbf16>,
    } else {
    }
    %c0 = arith.constant 0 : index
    %c0_1 = arith.constant 0 : index
    %c0_2 = arith.constant 0 : index
    %3 = vector.load %arg3[%c0, %c0_1, %c0_2] : memref<1x128x512xbf16, #tpu.memory_space<vmem>>, vector<1x128x512xbf16>
    %4 = vector.shape_cast %3 : vector<1x128x512xbf16> to vector<128x512xbf16>
    %c0_3 = arith.constant 0 : index
    %c0_4 = arith.constant 0 : index
    %c0_5 = arith.constant 0 : index
    %5 = vector.load %arg4[%c0_3, %c0_4, %c0_5] : memref<1x128x512xbf16, #tpu.memory_space<vmem>>, vector<1x128x512xbf16>
    %6 = vector.shape_cast %5 : vector<1x128x512xbf16> to vector<128x512xbf16>
    %c0_6 = arith.constant 0 : index
    %c0_7 = arith.constant 0 : index
    %c0_8 = arith.constant 0 : index
    %7 = vector.load %arg5[%c0_6, %c0_7, %c0_8] : memref<1x1x512xf32, #tpu.memory_space<vmem>>, vector<1x1x512xf32>
    %8 = vector.shape_cast %7 : vector<1x1x512xf32> to vector<1x512xf32>
    %c0_9 = arith.constant 0 : index
    %c0_10 = arith.constant 0 : index
    %c0_11 = arith.constant 0 : index
    %9 = vector.load %arg10[%c0_9, %c0_10, %c0_11] : memref<8x8x128xbf16, #tpu.memory_space<vmem>>, vector<8x8x128xbf16>
    %10 = vector.shape_cast %9 : vector<8x8x128xbf16> to vector<64x128xbf16>
    %cst = arith.constant dense<0.000000e+00> : vector<64x512xf32>
    %11 = tpu.matmul %10, %4, %cst {dimension_numbers = #tpu.dot_dimension_numbers<[1], [0], [0], [1], [0, 0, 1, 1], [], []>} : vector<64x128xbf16>, vector<128x512xbf16>, vector<64x512xf32> -> vector<64x512xf32>
    %12 = vector.shape_cast %11 : vector<64x512xf32> to vector<8x8x512xf32>
    %c0_12 = arith.constant 0 : index
    %c0_13 = arith.constant 0 : index
    %c0_14 = arith.constant 0 : index
    %13 = vector.load %arg9[%c0_12, %c0_13, %c0_14] : memref<8x8x512xf32, #tpu.memory_space<vmem>>, vector<8x8x512xf32>
    tpu.vector_store %arg9[%c0_12, %c0_13, %c0_14], %12 {strides = array<i32>} : memref<8x8x512xf32, #tpu.memory_space<vmem>>, vector<8x8x512xf32>,
    %cst_15 = arith.constant 0.000000e+00 : f32
    %14 = vector.broadcast %cst_15 : f32 to vector<8x128xf32>
    %cst_16 = arith.constant 0.000000e+00 : f32
    %15 = vector.broadcast %cst_16 : f32 to vector<8x128xf32>
    %c0_i32_17 = arith.constant 0 : i32
    %16 = arith.index_cast %c0_i32_17 : i32 to index
    %c0_18 = arith.constant 0 : index
    %c0_19 = arith.constant 0 : index
    %17 = vector.load %arg9[%16, %c0_18, %c0_19] : memref<8x8x512xf32, #tpu.memory_space<vmem>>, vector<1x8x512xf32>
    %18 = vector.shape_cast %17 : vector<1x8x512xf32> to vector<8x512xf32>
    %19 = arith.truncf %14 : vector<8x128xf32> to vector<8x128xbf16>
    %cst_20 = arith.constant dense<0.000000e+00> : vector<8x512xf32>
    %20 = tpu.matmul %19, %6, %cst_20 {dimension_numbers = #tpu.dot_dimension_numbers<[1], [0], [0], [1], [0, 0, 1, 1], [], []>} : vector<8x128xbf16>, vector<128x512xbf16>, vector<8x512xf32> -> vector<8x512xf32>
    %21 = arith.addf %18, %20 : vector<8x512xf32>
    %22 = vector.broadcast %8 : vector<1x512xf32> to vector<8x512xf32>
    %23 = arith.addf %21, %22 : vector<8x512xf32>
    %24 = vector.extract_strided_slice %23 {offsets = [0, 0], sizes = [8, 128], strides = [1, 1]} : vector<8x512xf32> to vector<8x128xf32>
    %25 = arith.negf %24 : vector<8x128xf32>
    %26 = math.exp %25 : vector<8x128xf32>
    %cst_21 = arith.constant 1.000000e+00 : f32
    %27 = vector.broadcast %cst_21 : f32 to vector<8x128xf32>
    %28 = arith.addf %27, %26 : vector<8x128xf32>
    %29 = arith.divf %27, %28 : vector<8x128xf32>
    %30 = vector.extract_strided_slice %23 {offsets = [0, 128], sizes = [8, 128], strides = [1, 1]} : vector<8x512xf32> to vector<8x128xf32>
    %31 = arith.negf %30 : vector<8x128xf32>
    %32 = math.exp %31 : vector<8x128xf32>
    %cst_22 = arith.constant 1.000000e+00 : f32
    %33 = vector.broadcast %cst_22 : f32 to vector<8x128xf32>
    %34 = arith.addf %33, %32 : vector<8x128xf32>
    %35 = arith.divf %33, %34 : vector<8x128xf32>
    %36 = vector.extract_strided_slice %23 {offsets = [0, 256], sizes = [8, 128], strides = [1, 1]} : vector<8x512xf32> to vector<8x128xf32>
    %37 = math.tanh %36 : vector<8x128xf32>
    %38 = vector.extract_strided_slice %23 {offsets = [0, 384], sizes = [8, 128], strides = [1, 1]} : vector<8x512xf32> to vector<8x128xf32>
    %39 = arith.negf %38 : vector<8x128xf32>
    %40 = math.exp %39 : vector<8x128xf32>
    %cst_23 = arith.constant 1.000000e+00 : f32
    %41 = vector.broadcast %cst_23 : f32 to vector<8x128xf32>
    %42 = arith.addf %41, %40 : vector<8x128xf32>
    %43 = arith.divf %41, %42 : vector<8x128xf32>
    %44 = arith.mulf %35, %15 : vector<8x128xf32>
    %45 = arith.mulf %29, %37 : vector<8x128xf32>
    %46 = arith.addf %44, %45 : vector<8x128xf32>
    %47 = math.tanh %46 : vector<8x128xf32>
    %48 = arith.mulf %43, %47 : vector<8x128xf32>
    %49 = arith.truncf %48 : vector<8x128xf32> to vector<8x128xbf16>
    %50 = arith.index_cast %c0_i32_17 : i32 to index
    %c0_24 = arith.constant 0 : index
    %c0_25 = arith.constant 0 : index
    %51 = vector.load %arg10[%50, %c0_24, %c0_25] : memref<8x8x128xbf16, #tpu.memory_space<vmem>>, vector<1x8x128xbf16>
    %52 = vector.shape_cast %51 : vector<1x8x128xbf16> to vector<8x128xbf16>
    %53 = vector.shape_cast %49 : vector<8x128xbf16> to vector<1x8x128xbf16>
    tpu.vector_store %arg10[%50, %c0_24, %c0_25], %53 {strides = array<i32>} : memref<8x8x128xbf16, #tpu.memory_space<vmem>>, vector<1x8x128xbf16>,
    %c1_i32 = arith.constant 1 : i32
    %54 = arith.index_cast %c1_i32 : i32 to index
    %c0_26 = arith.constant 0 : index
    %c0_27 = arith.constant 0 : index
    %55 = vector.load %arg9[%54, %c0_26, %c0_27] : memref<8x8x512xf32, #tpu.memory_space<vmem>>, vector<1x8x512xf32>
    %56 = vector.shape_cast %55 : vector<1x8x512xf32> to vector<8x512xf32>
    %57 = arith.truncf %48 : vector<8x128xf32> to vector<8x128xbf16>
    %cst_28 = arith.constant dense<0.000000e+00> : vector<8x512xf32>
    %58 = tpu.matmul %57, %6, %cst_28 {dimension_numbers = #tpu.dot_dimension_numbers<[1], [0], [0], [1], [0, 0, 1, 1], [], []>} : vector<8x128xbf16>, vector<128x512xbf16>, vector<8x512xf32> -> vector<8x512xf32>
    %59 = arith.addf %56, %58 : vector<8x512xf32>
    %60 = vector.broadcast %8 : vector<1x512xf32> to vector<8x512xf32>
    %61 = arith.addf %59, %60 : vector<8x512xf32>
    %62 = vector.extract_strided_slice %61 {offsets = [0, 0], sizes = [8, 128], strides = [1, 1]} : vector<8x512xf32> to vector<8x128xf32>
    %63 = arith.negf %62 : vector<8x128xf32>
    %64 = math.exp %63 : vector<8x128xf32>
    %cst_29 = arith.constant 1.000000e+00 : f32
    %65 = vector.broadcast %cst_29 : f32 to vector<8x128xf32>
    %66 = arith.addf %65, %64 : vector<8x128xf32>
    %67 = arith.divf %65, %66 : vector<8x128xf32>
    %68 = vector.extract_strided_slice %61 {offsets = [0, 128], sizes = [8, 128], strides = [1, 1]} : vector<8x512xf32> to vector<8x128xf32>
    %69 = arith.negf %68 : vector<8x128xf32>
    %70 = math.exp %69 : vector<8x128xf32>
    %cst_30 = arith.constant 1.000000e+00 : f32
    %71 = vector.broadcast %cst_30 : f32 to vector<8x128xf32>
    %72 = arith.addf %71, %70 : vector<8x128xf32>
    %73 = arith.divf %71, %72 : vector<8x128xf32>
    %74 = vector.extract_strided_slice %61 {offsets = [0, 256], sizes = [8, 128], strides = [1, 1]} : vector<8x512xf32> to vector<8x128xf32>
    %75 = math.tanh %74 : vector<8x128xf32>
    %76 = vector.extract_strided_slice %61 {offsets = [0, 384], sizes = [8, 128], strides = [1, 1]} : vector<8x512xf32> to vector<8x128xf32>
    %77 = arith.negf %76 : vector<8x128xf32>
    %78 = math.exp %77 : vector<8x128xf32>
    %cst_31 = arith.constant 1.000000e+00 : f32
    %79 = vector.broadcast %cst_31 : f32 to vector<8x128xf32>
    %80 = arith.addf %79, %78 : vector<8x128xf32>
    %81 = arith.divf %79, %80 : vector<8x128xf32>
    %82 = arith.mulf %73, %46 : vector<8x128xf32>
    %83 = arith.mulf %67, %75 : vector<8x128xf32>
    %84 = arith.addf %82, %83 : vector<8x128xf32>
    %85 = math.tanh %84 : vector<8x128xf32>
    %86 = arith.mulf %81, %85 : vector<8x128xf32>
    %87 = arith.truncf %86 : vector<8x128xf32> to vector<8x128xbf16>
    %88 = arith.index_cast %c1_i32 : i32 to index
    %c0_32 = arith.constant 0 : index
    %c0_33 = arith.constant 0 : index
    %89 = vector.load %arg10[%88, %c0_32, %c0_33] : memref<8x8x128xbf16, #tpu.memory_space<vmem>>, vector<1x8x128xbf16>
    %90 = vector.shape_cast %89 : vector<1x8x128xbf16> to vector<8x128xbf16>
    %91 = vector.shape_cast %87 : vector<8x128xbf16> to vector<1x8x128xbf16>
    tpu.vector_store %arg10[%88, %c0_32, %c0_33], %91 {strides = array<i32>} : memref<8x8x128xbf16, #tpu.memory_space<vmem>>, vector<1x8x128xbf16>,
    %c2_i32 = arith.constant 2 : i32
    %92 = arith.index_cast %c2_i32 : i32 to index
    %c0_34 = arith.constant 0 : index
    %c0_35 = arith.constant 0 : index
    %93 = vector.load %arg9[%92, %c0_34, %c0_35] : memref<8x8x512xf32, #tpu.memory_space<vmem>>, vector<1x8x512xf32>
    %94 = vector.shape_cast %93 : vector<1x8x512xf32> to vector<8x512xf32>
    %95 = arith.truncf %86 : vector<8x128xf32> to vector<8x128xbf16>
    %cst_36 = arith.constant dense<0.000000e+00> : vector<8x512xf32>
    %96 = tpu.matmul %95, %6, %cst_36 {dimension_numbers = #tpu.dot_dimension_numbers<[1], [0], [0], [1], [0, 0, 1, 1], [], []>} : vector<8x128xbf16>, vector<128x512xbf16>, vector<8x512xf32> -> vector<8x512xf32>
    %97 = arith.addf %94, %96 : vector<8x512xf32>
    %98 = vector.broadcast %8 : vector<1x512xf32> to vector<8x512xf32>
    %99 = arith.addf %97, %98 : vector<8x512xf32>
    %100 = vector.extract_strided_slice %99 {offsets = [0, 0], sizes = [8, 128], strides = [1, 1]} : vector<8x512xf32> to vector<8x128xf32>
    %101 = arith.negf %100 : vector<8x128xf32>
    %102 = math.exp %101 : vector<8x128xf32>
    %cst_37 = arith.constant 1.000000e+00 : f32
    %103 = vector.broadcast %cst_37 : f32 to vector<8x128xf32>
    %104 = arith.addf %103, %102 : vector<8x128xf32>
    %105 = arith.divf %103, %104 : vector<8x128xf32>
    %106 = vector.extract_strided_slice %99 {offsets = [0, 128], sizes = [8, 128], strides = [1, 1]} : vector<8x512xf32> to vector<8x128xf32>
    %107 = arith.negf %106 : vector<8x128xf32>
    %108 = math.exp %107 : vector<8x128xf32>
    %cst_38 = arith.constant 1.000000e+00 : f32
    %109 = vector.broadcast %cst_38 : f32 to vector<8x128xf32>
    %110 = arith.addf %109, %108 : vector<8x128xf32>
    %111 = arith.divf %109, %110 : vector<8x128xf32>
    %112 = vector.extract_strided_slice %99 {offsets = [0, 256], sizes = [8, 128], strides = [1, 1]} : vector<8x512xf32> to vector<8x128xf32>
    %113 = math.tanh %112 : vector<8x128xf32>
    %114 = vector.extract_strided_slice %99 {offsets = [0, 384], sizes = [8, 128], strides = [1, 1]} : vector<8x512xf32> to vector<8x128xf32>
    %115 = arith.negf %114 : vector<8x128xf32>
    %116 = math.exp %115 : vector<8x128xf32>
    %cst_39 = arith.constant 1.000000e+00 : f32
    %117 = vector.broadcast %cst_39 : f32 to vector<8x128xf32>
    %118 = arith.addf %117, %116 : vector<8x128xf32>
    %119 = arith.divf %117, %118 : vector<8x128xf32>
    %120 = arith.mulf %111, %84 : vector<8x128xf32>
    %121 = arith.mulf %105, %113 : vector<8x128xf32>
    %122 = arith.addf %120, %121 : vector<8x128xf32>
    %123 = math.tanh %122 : vector<8x128xf32>
    %124 = arith.mulf %119, %123 : vector<8x128xf32>
    %125 = arith.truncf %124 : vector<8x128xf32> to vector<8x128xbf16>
    %126 = arith.index_cast %c2_i32 : i32 to index
    %c0_40 = arith.constant 0 : index
    %c0_41 = arith.constant 0 : index
    %127 = vector.load %arg10[%126, %c0_40, %c0_41] : memref<8x8x128xbf16, #tpu.memory_space<vmem>>, vector<1x8x128xbf16>
    %128 = vector.shape_cast %127 : vector<1x8x128xbf16> to vector<8x128xbf16>
    %129 = vector.shape_cast %125 : vector<8x128xbf16> to vector<1x8x128xbf16>
    tpu.vector_store %arg10[%126, %c0_40, %c0_41], %129 {strides = array<i32>} : memref<8x8x128xbf16, #tpu.memory_space<vmem>>, vector<1x8x128xbf16>,
    %c3_i32 = arith.constant 3 : i32
    %130 = arith.index_cast %c3_i32 : i32 to index
    %c0_42 = arith.constant 0 : index
    %c0_43 = arith.constant 0 : index
    %131 = vector.load %arg9[%130, %c0_42, %c0_43] : memref<8x8x512xf32, #tpu.memory_space<vmem>>, vector<1x8x512xf32>
    %132 = vector.shape_cast %131 : vector<1x8x512xf32> to vector<8x512xf32>
    %133 = arith.truncf %124 : vector<8x128xf32> to vector<8x128xbf16>
    %cst_44 = arith.constant dense<0.000000e+00> : vector<8x512xf32>
    %134 = tpu.matmul %133, %6, %cst_44 {dimension_numbers = #tpu.dot_dimension_numbers<[1], [0], [0], [1], [0, 0, 1, 1], [], []>} : vector<8x128xbf16>, vector<128x512xbf16>, vector<8x512xf32> -> vector<8x512xf32>
    %135 = arith.addf %132, %134 : vector<8x512xf32>
    %136 = vector.broadcast %8 : vector<1x512xf32> to vector<8x512xf32>
    %137 = arith.addf %135, %136 : vector<8x512xf32>
    %138 = vector.extract_strided_slice %137 {offsets = [0, 0], sizes = [8, 128], strides = [1, 1]} : vector<8x512xf32> to vector<8x128xf32>
    %139 = arith.negf %138 : vector<8x128xf32>
    %140 = math.exp %139 : vector<8x128xf32>
    %cst_45 = arith.constant 1.000000e+00 : f32
    %141 = vector.broadcast %cst_45 : f32 to vector<8x128xf32>
    %142 = arith.addf %141, %140 : vector<8x128xf32>
    %143 = arith.divf %141, %142 : vector<8x128xf32>
    %144 = vector.extract_strided_slice %137 {offsets = [0, 128], sizes = [8, 128], strides = [1, 1]} : vector<8x512xf32> to vector<8x128xf32>
    %145 = arith.negf %144 : vector<8x128xf32>
    %146 = math.exp %145 : vector<8x128xf32>
    %cst_46 = arith.constant 1.000000e+00 : f32
    %147 = vector.broadcast %cst_46 : f32 to vector<8x128xf32>
    %148 = arith.addf %147, %146 : vector<8x128xf32>
    %149 = arith.divf %147, %148 : vector<8x128xf32>
    %150 = vector.extract_strided_slice %137 {offsets = [0, 256], sizes = [8, 128], strides = [1, 1]} : vector<8x512xf32> to vector<8x128xf32>
    %151 = math.tanh %150 : vector<8x128xf32>
    %152 = vector.extract_strided_slice %137 {offsets = [0, 384], sizes = [8, 128], strides = [1, 1]} : vector<8x512xf32> to vector<8x128xf32>
    %153 = arith.negf %152 : vector<8x128xf32>
    %154 = math.exp %153 : vector<8x128xf32>
    %cst_47 = arith.constant 1.000000e+00 : f32
    %155 = vector.broadcast %cst_47 : f32 to vector<8x128xf32>
    %156 = arith.addf %155, %154 : vector<8x128xf32>
    %157 = arith.divf %155, %156 : vector<8x128xf32>
    %158 = arith.mulf %149, %122 : vector<8x128xf32>
    %159 = arith.mulf %143, %151 : vector<8x128xf32>
    %160 = arith.addf %158, %159 : vector<8x128xf32>
    %161 = math.tanh %160 : vector<8x128xf32>
    %162 = arith.mulf %157, %161 : vector<8x128xf32>
    %163 = arith.truncf %162 : vector<8x128xf32> to vector<8x128xbf16>
    %164 = arith.index_cast %c3_i32 : i32 to index
    %c0_48 = arith.constant 0 : index
    %c0_49 = arith.constant 0 : index
    %165 = vector.load %arg10[%164, %c0_48, %c0_49] : memref<8x8x128xbf16, #tpu.memory_space<vmem>>, vector<1x8x128xbf16>
    %166 = vector.shape_cast %165 : vector<1x8x128xbf16> to vector<8x128xbf16>
    %167 = vector.shape_cast %163 : vector<8x128xbf16> to vector<1x8x128xbf16>
    tpu.vector_store %arg10[%164, %c0_48, %c0_49], %167 {strides = array<i32>} : memref<8x8x128xbf16, #tpu.memory_space<vmem>>, vector<1x8x128xbf16>,
    %c4_i32 = arith.constant 4 : i32
    %168 = arith.index_cast %c4_i32 : i32 to index
    %c0_50 = arith.constant 0 : index
    %c0_51 = arith.constant 0 : index
    %169 = vector.load %arg9[%168, %c0_50, %c0_51] : memref<8x8x512xf32, #tpu.memory_space<vmem>>, vector<1x8x512xf32>
    %170 = vector.shape_cast %169 : vector<1x8x512xf32> to vector<8x512xf32>
    %171 = arith.truncf %162 : vector<8x128xf32> to vector<8x128xbf16>
    %cst_52 = arith.constant dense<0.000000e+00> : vector<8x512xf32>
    %172 = tpu.matmul %171, %6, %cst_52 {dimension_numbers = #tpu.dot_dimension_numbers<[1], [0], [0], [1], [0, 0, 1, 1], [], []>} : vector<8x128xbf16>, vector<128x512xbf16>, vector<8x512xf32> -> vector<8x512xf32>
    %173 = arith.addf %170, %172 : vector<8x512xf32>
    %174 = vector.broadcast %8 : vector<1x512xf32> to vector<8x512xf32>
    %175 = arith.addf %173, %174 : vector<8x512xf32>
    %176 = vector.extract_strided_slice %175 {offsets = [0, 0], sizes = [8, 128], strides = [1, 1]} : vector<8x512xf32> to vector<8x128xf32>
    %177 = arith.negf %176 : vector<8x128xf32>
    %178 = math.exp %177 : vector<8x128xf32>
    %cst_53 = arith.constant 1.000000e+00 : f32
    %179 = vector.broadcast %cst_53 : f32 to vector<8x128xf32>
    %180 = arith.addf %179, %178 : vector<8x128xf32>
    %181 = arith.divf %179, %180 : vector<8x128xf32>
    %182 = vector.extract_strided_slice %175 {offsets = [0, 128], sizes = [8, 128], strides = [1, 1]} : vector<8x512xf32> to vector<8x128xf32>
    %183 = arith.negf %182 : vector<8x128xf32>
    %184 = math.exp %183 : vector<8x128xf32>
    %cst_54 = arith.constant 1.000000e+00 : f32
    %185 = vector.broadcast %cst_54 : f32 to vector<8x128xf32>
    %186 = arith.addf %185, %184 : vector<8x128xf32>
    %187 = arith.divf %185, %186 : vector<8x128xf32>
    %188 = vector.extract_strided_slice %175 {offsets = [0, 256], sizes = [8, 128], strides = [1, 1]} : vector<8x512xf32> to vector<8x128xf32>
    %189 = math.tanh %188 : vector<8x128xf32>
    %190 = vector.extract_strided_slice %175 {offsets = [0, 384], sizes = [8, 128], strides = [1, 1]} : vector<8x512xf32> to vector<8x128xf32>
    %191 = arith.negf %190 : vector<8x128xf32>
    %192 = math.exp %191 : vector<8x128xf32>
    %cst_55 = arith.constant 1.000000e+00 : f32
    %193 = vector.broadcast %cst_55 : f32 to vector<8x128xf32>
    %194 = arith.addf %193, %192 : vector<8x128xf32>
    %195 = arith.divf %193, %194 : vector<8x128xf32>
    %196 = arith.mulf %187, %160 : vector<8x128xf32>
    %197 = arith.mulf %181, %189 : vector<8x128xf32>
    %198 = arith.addf %196, %197 : vector<8x128xf32>
    %199 = math.tanh %198 : vector<8x128xf32>
    %200 = arith.mulf %195, %199 : vector<8x128xf32>
    %201 = arith.truncf %200 : vector<8x128xf32> to vector<8x128xbf16>
    %202 = arith.index_cast %c4_i32 : i32 to index
    %c0_56 = arith.constant 0 : index
    %c0_57 = arith.constant 0 : index
    %203 = vector.load %arg10[%202, %c0_56, %c0_57] : memref<8x8x128xbf16, #tpu.memory_space<vmem>>, vector<1x8x128xbf16>
    %204 = vector.shape_cast %203 : vector<1x8x128xbf16> to vector<8x128xbf16>
    %205 = vector.shape_cast %201 : vector<8x128xbf16> to vector<1x8x128xbf16>
    tpu.vector_store %arg10[%202, %c0_56, %c0_57], %205 {strides = array<i32>} : memref<8x8x128xbf16, #tpu.memory_space<vmem>>, vector<1x8x128xbf16>,
    %c5_i32 = arith.constant 5 : i32
    %206 = arith.index_cast %c5_i32 : i32 to index
    %c0_58 = arith.constant 0 : index
    %c0_59 = arith.constant 0 : index
    %207 = vector.load %arg9[%206, %c0_58, %c0_59] : memref<8x8x512xf32, #tpu.memory_space<vmem>>, vector<1x8x512xf32>
    %208 = vector.shape_cast %207 : vector<1x8x512xf32> to vector<8x512xf32>
    %209 = arith.truncf %200 : vector<8x128xf32> to vector<8x128xbf16>
    %cst_60 = arith.constant dense<0.000000e+00> : vector<8x512xf32>
    %210 = tpu.matmul %209, %6, %cst_60 {dimension_numbers = #tpu.dot_dimension_numbers<[1], [0], [0], [1], [0, 0, 1, 1], [], []>} : vector<8x128xbf16>, vector<128x512xbf16>, vector<8x512xf32> -> vector<8x512xf32>
    %211 = arith.addf %208, %210 : vector<8x512xf32>
    %212 = vector.broadcast %8 : vector<1x512xf32> to vector<8x512xf32>
    %213 = arith.addf %211, %212 : vector<8x512xf32>
    %214 = vector.extract_strided_slice %213 {offsets = [0, 0], sizes = [8, 128], strides = [1, 1]} : vector<8x512xf32> to vector<8x128xf32>
    %215 = arith.negf %214 : vector<8x128xf32>
    %216 = math.exp %215 : vector<8x128xf32>
    %cst_61 = arith.constant 1.000000e+00 : f32
    %217 = vector.broadcast %cst_61 : f32 to vector<8x128xf32>
    %218 = arith.addf %217, %216 : vector<8x128xf32>
    %219 = arith.divf %217, %218 : vector<8x128xf32>
    %220 = vector.extract_strided_slice %213 {offsets = [0, 128], sizes = [8, 128], strides = [1, 1]} : vector<8x512xf32> to vector<8x128xf32>
    %221 = arith.negf %220 : vector<8x128xf32>
    %222 = math.exp %221 : vector<8x128xf32>
    %cst_62 = arith.constant 1.000000e+00 : f32
    %223 = vector.broadcast %cst_62 : f32 to vector<8x128xf32>
    %224 = arith.addf %223, %222 : vector<8x128xf32>
    %225 = arith.divf %223, %224 : vector<8x128xf32>
    %226 = vector.extract_strided_slice %213 {offsets = [0, 256], sizes = [8, 128], strides = [1, 1]} : vector<8x512xf32> to vector<8x128xf32>
    %227 = math.tanh %226 : vector<8x128xf32>
    %228 = vector.extract_strided_slice %213 {offsets = [0, 384], sizes = [8, 128], strides = [1, 1]} : vector<8x512xf32> to vector<8x128xf32>
    %229 = arith.negf %228 : vector<8x128xf32>
    %230 = math.exp %229 : vector<8x128xf32>
    %cst_63 = arith.constant 1.000000e+00 : f32
    %231 = vector.broadcast %cst_63 : f32 to vector<8x128xf32>
    %232 = arith.addf %231, %230 : vector<8x128xf32>
    %233 = arith.divf %231, %232 : vector<8x128xf32>
    %234 = arith.mulf %225, %198 : vector<8x128xf32>
    %235 = arith.mulf %219, %227 : vector<8x128xf32>
    %236 = arith.addf %234, %235 : vector<8x128xf32>
    %237 = math.tanh %236 : vector<8x128xf32>
    %238 = arith.mulf %233, %237 : vector<8x128xf32>
    %239 = arith.truncf %238 : vector<8x128xf32> to vector<8x128xbf16>
    %240 = arith.index_cast %c5_i32 : i32 to index
    %c0_64 = arith.constant 0 : index
    %c0_65 = arith.constant 0 : index
    %241 = vector.load %arg10[%240, %c0_64, %c0_65] : memref<8x8x128xbf16, #tpu.memory_space<vmem>>, vector<1x8x128xbf16>
    %242 = vector.shape_cast %241 : vector<1x8x128xbf16> to vector<8x128xbf16>
    %243 = vector.shape_cast %239 : vector<8x128xbf16> to vector<1x8x128xbf16>
    tpu.vector_store %arg10[%240, %c0_64, %c0_65], %243 {strides = array<i32>} : memref<8x8x128xbf16, #tpu.memory_space<vmem>>, vector<1x8x128xbf16>,
    %c6_i32 = arith.constant 6 : i32
    %244 = arith.index_cast %c6_i32 : i32 to index
    %c0_66 = arith.constant 0 : index
    %c0_67 = arith.constant 0 : index
    %245 = vector.load %arg9[%244, %c0_66, %c0_67] : memref<8x8x512xf32, #tpu.memory_space<vmem>>, vector<1x8x512xf32>
    %246 = vector.shape_cast %245 : vector<1x8x512xf32> to vector<8x512xf32>
    %247 = arith.truncf %238 : vector<8x128xf32> to vector<8x128xbf16>
    %cst_68 = arith.constant dense<0.000000e+00> : vector<8x512xf32>
    %248 = tpu.matmul %247, %6, %cst_68 {dimension_numbers = #tpu.dot_dimension_numbers<[1], [0], [0], [1], [0, 0, 1, 1], [], []>} : vector<8x128xbf16>, vector<128x512xbf16>, vector<8x512xf32> -> vector<8x512xf32>
    %249 = arith.addf %246, %248 : vector<8x512xf32>
    %250 = vector.broadcast %8 : vector<1x512xf32> to vector<8x512xf32>
    %251 = arith.addf %249, %250 : vector<8x512xf32>
    %252 = vector.extract_strided_slice %251 {offsets = [0, 0], sizes = [8, 128], strides = [1, 1]} : vector<8x512xf32> to vector<8x128xf32>
    %253 = arith.negf %252 : vector<8x128xf32>
    %254 = math.exp %253 : vector<8x128xf32>
    %cst_69 = arith.constant 1.000000e+00 : f32
    %255 = vector.broadcast %cst_69 : f32 to vector<8x128xf32>
    %256 = arith.addf %255, %254 : vector<8x128xf32>
    %257 = arith.divf %255, %256 : vector<8x128xf32>
    %258 = vector.extract_strided_slice %251 {offsets = [0, 128], sizes = [8, 128], strides = [1, 1]} : vector<8x512xf32> to vector<8x128xf32>
    %259 = arith.negf %258 : vector<8x128xf32>
    %260 = math.exp %259 : vector<8x128xf32>
    %cst_70 = arith.constant 1.000000e+00 : f32
    %261 = vector.broadcast %cst_70 : f32 to vector<8x128xf32>
    %262 = arith.addf %261, %260 : vector<8x128xf32>
    %263 = arith.divf %261, %262 : vector<8x128xf32>
    %264 = vector.extract_strided_slice %251 {offsets = [0, 256], sizes = [8, 128], strides = [1, 1]} : vector<8x512xf32> to vector<8x128xf32>
    %265 = math.tanh %264 : vector<8x128xf32>
    %266 = vector.extract_strided_slice %251 {offsets = [0, 384], sizes = [8, 128], strides = [1, 1]} : vector<8x512xf32> to vector<8x128xf32>
    %267 = arith.negf %266 : vector<8x128xf32>
    %268 = math.exp %267 : vector<8x128xf32>
    %cst_71 = arith.constant 1.000000e+00 : f32
    %269 = vector.broadcast %cst_71 : f32 to vector<8x128xf32>
    %270 = arith.addf %269, %268 : vector<8x128xf32>
    %271 = arith.divf %269, %270 : vector<8x128xf32>
    %272 = arith.mulf %263, %236 : vector<8x128xf32>
    %273 = arith.mulf %257, %265 : vector<8x128xf32>
    %274 = arith.addf %272, %273 : vector<8x128xf32>
    %275 = math.tanh %274 : vector<8x128xf32>
    %276 = arith.mulf %271, %275 : vector<8x128xf32>
    %277 = arith.truncf %276 : vector<8x128xf32> to vector<8x128xbf16>
    %278 = arith.index_cast %c6_i32 : i32 to index
    %c0_72 = arith.constant 0 : index
    %c0_73 = arith.constant 0 : index
    %279 = vector.load %arg10[%278, %c0_72, %c0_73] : memref<8x8x128xbf16, #tpu.memory_space<vmem>>, vector<1x8x128xbf16>
    %280 = vector.shape_cast %279 : vector<1x8x128xbf16> to vector<8x128xbf16>
    %281 = vector.shape_cast %277 : vector<8x128xbf16> to vector<1x8x128xbf16>
    tpu.vector_store %arg10[%278, %c0_72, %c0_73], %281 {strides = array<i32>} : memref<8x8x128xbf16, #tpu.memory_space<vmem>>, vector<1x8x128xbf16>,
    %c7_i32 = arith.constant 7 : i32
    %282 = arith.index_cast %c7_i32 : i32 to index
    %c0_74 = arith.constant 0 : index
    %c0_75 = arith.constant 0 : index
    %283 = vector.load %arg9[%282, %c0_74, %c0_75] : memref<8x8x512xf32, #tpu.memory_space<vmem>>, vector<1x8x512xf32>
    %284 = vector.shape_cast %283 : vector<1x8x512xf32> to vector<8x512xf32>
    %285 = arith.truncf %276 : vector<8x128xf32> to vector<8x128xbf16>
    %cst_76 = arith.constant dense<0.000000e+00> : vector<8x512xf32>
    %286 = tpu.matmul %285, %6, %cst_76 {dimension_numbers = #tpu.dot_dimension_numbers<[1], [0], [0], [1], [0, 0, 1, 1], [], []>} : vector<8x128xbf16>, vector<128x512xbf16>, vector<8x512xf32> -> vector<8x512xf32>
    %287 = arith.addf %284, %286 : vector<8x512xf32>
    %288 = vector.broadcast %8 : vector<1x512xf32> to vector<8x512xf32>
    %289 = arith.addf %287, %288 : vector<8x512xf32>
    %290 = vector.extract_strided_slice %289 {offsets = [0, 0], sizes = [8, 128], strides = [1, 1]} : vector<8x512xf32> to vector<8x128xf32>
    %291 = arith.negf %290 : vector<8x128xf32>
    %292 = math.exp %291 : vector<8x128xf32>
    %cst_77 = arith.constant 1.000000e+00 : f32
    %293 = vector.broadcast %cst_77 : f32 to vector<8x128xf32>
    %294 = arith.addf %293, %292 : vector<8x128xf32>
    %295 = arith.divf %293, %294 : vector<8x128xf32>
    %296 = vector.extract_strided_slice %289 {offsets = [0, 128], sizes = [8, 128], strides = [1, 1]} : vector<8x512xf32> to vector<8x128xf32>
    %297 = arith.negf %296 : vector<8x128xf32>
    %298 = math.exp %297 : vector<8x128xf32>
    %cst_78 = arith.constant 1.000000e+00 : f32
    %299 = vector.broadcast %cst_78 : f32 to vector<8x128xf32>
    %300 = arith.addf %299, %298 : vector<8x128xf32>
    %301 = arith.divf %299, %300 : vector<8x128xf32>
    %302 = vector.extract_strided_slice %289 {offsets = [0, 256], sizes = [8, 128], strides = [1, 1]} : vector<8x512xf32> to vector<8x128xf32>
    %303 = math.tanh %302 : vector<8x128xf32>
    %304 = vector.extract_strided_slice %289 {offsets = [0, 384], sizes = [8, 128], strides = [1, 1]} : vector<8x512xf32> to vector<8x128xf32>
    %305 = arith.negf %304 : vector<8x128xf32>
    %306 = math.exp %305 : vector<8x128xf32>
    %cst_79 = arith.constant 1.000000e+00 : f32
    %307 = vector.broadcast %cst_79 : f32 to vector<8x128xf32>
    %308 = arith.addf %307, %306 : vector<8x128xf32>
    %309 = arith.divf %307, %308 : vector<8x128xf32>
    %310 = arith.mulf %301, %274 : vector<8x128xf32>
    %311 = arith.mulf %295, %303 : vector<8x128xf32>
    %312 = arith.addf %310, %311 : vector<8x128xf32>
    %313 = math.tanh %312 : vector<8x128xf32>
    %314 = arith.mulf %309, %313 : vector<8x128xf32>
    %315 = arith.truncf %314 : vector<8x128xf32> to vector<8x128xbf16>
    %316 = arith.index_cast %c7_i32 : i32 to index
    %c0_80 = arith.constant 0 : index
    %c0_81 = arith.constant 0 : index
    %317 = vector.load %arg10[%316, %c0_80, %c0_81] : memref<8x8x128xbf16, #tpu.memory_space<vmem>>, vector<1x8x128xbf16>
    %318 = vector.shape_cast %317 : vector<1x8x128xbf16> to vector<8x128xbf16>
    %319 = vector.shape_cast %315 : vector<8x128xbf16> to vector<1x8x128xbf16>
    tpu.vector_store %arg10[%316, %c0_80, %c0_81], %319 {strides = array<i32>} : memref<8x8x128xbf16, #tpu.memory_space<vmem>>, vector<1x8x128xbf16>,
    %c8_i32 = arith.constant 8 : i32
    %c1_i32_82 = arith.constant 1 : i32
    %320 = arith.cmpi eq, %arg1, %c1_i32_82 : i32
    %321 = arith.extui %320 : i1 to i32
    %c0_i32_83 = arith.constant 0 : i32
    %322 = arith.cmpi ne, %321, %c0_i32_83 : i32
    scf.if %322 {
      %c0_84 = arith.constant 0 : index
      %c0_85 = arith.constant 0 : index
      %323 = vector.load %arg6[%c0_84, %c0_85] : memref<1x128xf32, #tpu.memory_space<vmem>>, vector<1x128xf32>
      %324 = vector.broadcast %323 : vector<1x128xf32> to vector<8x128xf32>
      %325 = arith.mulf %314, %324 : vector<8x128xf32>
      %cst_86 = arith.constant dense<0.000000e+00> : vector<8xf32>
      %326 = vector.multi_reduction <add>, %325, %cst_86 [1] : vector<8x128xf32> to vector<8xf32>
      %327 = vector.shape_cast %326 : vector<8xf32> to vector<8x1xf32>
      %c0_87 = arith.constant 0 : index
      %c0_88 = arith.constant 0 : index
      %328 = vector.load %arg7[%c0_87, %c0_88] : memref<1x1xf32, #tpu.memory_space<vmem>>, vector<1x1xf32>
      %329 = vector.broadcast %328 : vector<1x1xf32> to vector<8x1xf32>
      %330 = arith.addf %327, %329 : vector<8x1xf32>
      %c0_89 = arith.constant 0 : index
      %c0_90 = arith.constant 0 : index
      %331 = vector.load %arg8[%c0_89, %c0_90] : memref<8x1xf32, #tpu.memory_space<vmem>>, vector<8x1xf32>
      tpu.vector_store %arg8[%c0_89, %c0_90], %330 {strides = array<i32>} : memref<8x1xf32, #tpu.memory_space<vmem>>, vector<8x1xf32>,
    } else {
    }
    return
  }
  func.func @transform_0(%arg0: i32, %arg1: i32) -> (i32, i32, i32) {
    %c0_i32 = arith.constant 0 : i32
    %c0_i32_0 = arith.constant 0 : i32
    %c0_i32_1 = arith.constant 0 : i32
    return %c0_i32, %arg0, %c0_i32_0 : i32, i32, i32
  }
  func.func @transform_1(%arg0: i32, %arg1: i32) -> (i32, i32, i32) {
    %c0_i32 = arith.constant 0 : i32
    %c0_i32_0 = arith.constant 0 : i32
    %c0_i32_1 = arith.constant 0 : i32
    return %arg1, %c0_i32, %c0_i32_0 : i32, i32, i32
  }
  func.func @transform_2(%arg0: i32, %arg1: i32) -> (i32, i32, i32) {
    %c0_i32 = arith.constant 0 : i32
    %c0_i32_0 = arith.constant 0 : i32
    %c0_i32_1 = arith.constant 0 : i32
    return %arg1, %c0_i32, %c0_i32_0 : i32, i32, i32
  }
  func.func @transform_3(%arg0: i32, %arg1: i32) -> (i32, i32, i32) {
    %c0_i32 = arith.constant 0 : i32
    %c0_i32_0 = arith.constant 0 : i32
    %c0_i32_1 = arith.constant 0 : i32
    return %arg1, %c0_i32, %c0_i32_0 : i32, i32, i32
  }
  func.func @transform_4(%arg0: i32, %arg1: i32) -> (i32, i32) {
    %c0_i32 = arith.constant 0 : i32
    %c0_i32_0 = arith.constant 0 : i32
    %c0_i32_1 = arith.constant 0 : i32
    return %c0_i32, %c0_i32_0 : i32, i32
  }
  func.func @transform_5(%arg0: i32, %arg1: i32) -> (i32, i32) {
    %c0_i32 = arith.constant 0 : i32
    %c0_i32_0 = arith.constant 0 : i32
    %c0_i32_1 = arith.constant 0 : i32
    return %c0_i32, %c0_i32_0 : i32, i32
  }
  func.func @transform_6(%arg0: i32, %arg1: i32) -> (i32, i32) {
    %c0_i32 = arith.constant 0 : i32
    %c0_i32_0 = arith.constant 0 : i32
    return %arg0, %c0_i32 : i32, i32
  }
}

</mosaic_0001>

<llo_original>
// kernel: tpu_custom_call.1
$region0: #{tpu_custom_call.1}
  #allocation0 [shape = 'u32[]', space=smem, size = 0x4, offset = 0x4, fixed_abs, tag = 'smem constant byte address 0x4 - core index']
  #allocation1 [shape = 'u32[144,128]{1,0:T(1,128)}', space=vmem, size = 0x12000, scoped, tag = 'internal scratch']
  #allocation2 [shape = 'f32[8,8,512]{2,1,0:T(8,128)}', space=vmem, size = 0x20000, scoped, tag = 'scratch operand']
  #allocation3 [shape = 'bf16[8,8,128]{2,1,0:T(8,128)(2,1)}', space=vmem, size = 0x4000, scoped, tag = 'scratch operand']
  #allocation4 [shape = 'f32[1,1]{1,0:T(1,128)S(1)}', space=vmem, size = 0x200, scoped, tag = 'scoped memory for tpu_custom_call.1']
  %s0 = inlined_call_operand.hbm [shape: bf16[8,8,128], index: 0, kind: input, shape index: {}]
  %s1 = inlined_call_operand.hbm [shape: bf16[2,128,512], index: 1, kind: input, shape index: {}]
  %s2 = inlined_call_operand.hbm [shape: bf16[2,128,512], index: 2, kind: input, shape index: {}]
  %s3 = inlined_call_operand.hbm [shape: f32[2,1,512], index: 3, kind: input, shape index: {}]
  %s4 = inlined_call_operand.vmem [shape: f32[1,128], index: 4, kind: input, shape index: {}]
  %s5 = inlined_call_operand.<no memory space> [shape: f32[1,1], index: 5, kind: input, shape index: {}]
  %s6 = inlined_call_operand.vmem [shape: f32[8,1], index: 6, kind: output, shape index: {}]
  %s7 = sld [smem:[#allocation0]]
  $region81: #{tpu_custom_call.1} parent=0
    _
  %s9 = ssub.s32 1, %s7
  %s10 = scalar_select 0, %s9, %s7
  %v11 = vstv %s5
  %12 = vst [vmem:[#allocation4] sm:$0x1] %v11
  $region1: #{tpu_custom_call.1} parent=0
    #allocation5 [shape = 'u8[16384]{0}', space=vmem, size = 0x4000, scoped, tag = 'input window, operand 0, single buffered']
    #allocation6 [shape = 's32[2]{0}', space=sflag, size = 0x8, scoped, tag = 'scoped memory for tpu_custom_call.1']
    #allocation7 [shape = 'u8[262144]{0}', space=vmem, size = 0x40000, scoped, tag = 'input window, operand 1']
    #allocation8 [shape = 's32[2]{0}', space=sflag, size = 0x8, scoped, tag = 'scoped memory for tpu_custom_call.1']
    #allocation9 [shape = 'u8[262144]{0}', space=vmem, size = 0x40000, scoped, tag = 'input window, operand 2']
    #allocation10 [shape = 'u8[4096]{0}', space=vmem, size = 0x1000, scoped, tag = 'input window, operand 3']
    #allocation11 [shape = 's32[2]{0}', space=sflag, size = 0x8, scoped, tag = 'scoped memory for tpu_custom_call.1']
    %13 = vsyncpa [#allocation6], 0
    %14 = vsyncpa [#allocation8], 0
    %s15 = scalar_lea.sflag [#allocation8], 1
    %16 = vsyncpa %s15, 0
    %17 = vsyncpa [#allocation11], 0
    %s18 = scalar_lea.sflag [#allocation11], 1
    %19 = vsyncpa %s18, 0
    loop: start=0, step=1, limit=4
    $region2: #{tpu_custom_call.1} parent=1 // loop_pre_header
      _
    $region3: #{tpu_custom_call.1} parent=1 // loop_header
      %s21 = sphi 0, %s25
      %p22 = scmp.ge.s32.totalorder %s21, 4
      %s28 = sphi 0, %s40
      %s29 = sphi 0, %s36
      %s30 = sphi 0, %s28
      %s31 = sphi 0, %s29
      %s32 = sphi 0, %s30
      %s33 = sphi 0, %s31
      %s43 = sphi 0, %s45
      %s46 = sphi 0, %s43
      %s47 = sphi 0, %s46
      %s63 = sphi 0, %s47
      %s69 = sphi 0, %s71
      %s72 = sphi 0, %s69
      %s73 = sphi 0, %s72
      %s89 = sphi 0, %s73
      %s95 = sphi 0, %s97
      %s98 = sphi 0, %s95
      %s99 = sphi 0, %s98
      %s115 = sphi 0, %s99
      %s121 = sphi 0, %s123
      %s124 = sphi 0, %s121
      %s125 = sphi 0, %s124
      %s141 = sphi 0, %s125
      %s145 = sphi 0, %s145
      %s147 = sphi 0, %s145
      %s148 = sphi 0, %s147
      %s162 = sphi 0, %s148
      %s166 = sphi 0, %s166
      %s168 = sphi 0, %s166
      %s169 = sphi 0, %s168
      %s183 = sphi 0, %s169
      %s189 = sphi 0, %s191
      %s192 = sphi 0, %s189
      %s193 = sphi 0, %s192
      %s209 = sphi 0, %s193
    $region4: #{tpu_custom_call.1} parent=1 // loop_header_branch
      %24 = sbr.rel (%p22) target = $region8
    $region5: #{tpu_custom_call.1} parent=1 // loop_body
      %s26 = ssub.s32 %s21, 1
      %s27 = ssub.s32 %s21, 2
      %s34 = sadd.s32 1, %s29
      %p35 = scmp.ge.s32.totalorder %s34, 2
      %s36 = scalar_select %p35, 0, %s34
      %s37 = sadd.s32 1, %s28
      %s38 = scalar_select %p35, %s37, %s28
      %p39 = scmp.ge.s32.totalorder %s38, 1
      %s40 = scalar_select %p39, 0, %s38
      %s41 = ssub.s32 %s28, %s40
      %p42 = scmp.eq.s32.totalorder %s41, 0
      %s44 = sadd.s32 %s43, 1
      %s45 = scalar_select %p42, %s43, %s44
      %p48 = pneg %p42
      %p49 = scmp.eq.s32.totalorder %s21, 1
      %p50 = por %p48, %p49
      %p51 = scmp.ne.s32.totalorder %s43, %s46
      %p52 = scmp.eq.s32.totalorder %s21, 0
      %p53 = por %p51, %p52
      %p54 = scmp.ne.s32.totalorder %s43, %s46
      %p55 = scmp.eq.s32.totalorder %s26, 1
      %p56 = por %p54, %p55
      %p57 = scmp.ne.s32.totalorder %s46, %s47
      %p58 = scmp.eq.s32.totalorder %s26, 0
      %p59 = por %p57, %p58
      %p60 = scmp.ne.s32.totalorder %s46, %s47
      %p61 = scmp.eq.s32.totalorder %s27, 1
      %p62 = por %p60, %p61
      %p64 = scmp.ne.s32.totalorder %s47, %s63
      %p65 = scmp.eq.s32.totalorder %s27, 0
      %p66 = por %p64, %p65
      %s67 = ssub.s32 %s29, %s36
      %p68 = scmp.eq.s32.totalorder %s67, 0
      %s70 = sadd.s32 %s69, 1
      %s71 = scalar_select %p68, %s69, %s70
      %p74 = pneg %p68
      %p75 = scmp.eq.s32.totalorder %s21, 1
      %p76 = por %p74, %p75
      %p77 = scmp.ne.s32.totalorder %s69, %s72
      %p78 = scmp.eq.s32.totalorder %s21, 0
      %p79 = por %p77, %p78
      %p80 = scmp.ne.s32.totalorder %s69, %s72
      %p81 = scmp.eq.s32.totalorder %s26, 1
      %p82 = por %p80, %p81
      %p83 = scmp.ne.s32.totalorder %s72, %s73
      %p84 = scmp.eq.s32.totalorder %s26, 0
      %p85 = por %p83, %p84
      %p86 = scmp.ne.s32.totalorder %s72, %s73
      %p87 = scmp.eq.s32.totalorder %s27, 1
      %p88 = por %p86, %p87
      %p90 = scmp.ne.s32.totalorder %s73, %s89
      %p91 = scmp.eq.s32.totalorder %s27, 0
      %p92 = por %p90, %p91
      %s93 = ssub.s32 %s29, %s36
      %p94 = scmp.eq.s32.totalorder %s93, 0
      %s96 = sadd.s32 %s95, 1
      %s97 = scalar_select %p94, %s95, %s96
      %p100 = pneg %p94
      %p101 = scmp.eq.s32.totalorder %s21, 1
      %p102 = por %p100, %p101
      %p103 = scmp.ne.s32.totalorder %s95, %s98
      %p104 = scmp.eq.s32.totalorder %s21, 0
      %p105 = por %p103, %p104
      %p106 = scmp.ne.s32.totalorder %s95, %s98
      %p107 = scmp.eq.s32.totalorder %s26, 1
      %p108 = por %p106, %p107
      %p109 = scmp.ne.s32.totalorder %s98, %s99
      %p110 = scmp.eq.s32.totalorder %s26, 0
      %p111 = por %p109, %p110
      %p112 = scmp.ne.s32.totalorder %s98, %s99
      %p113 = scmp.eq.s32.totalorder %s27, 1
      %p114 = por %p112, %p113
      %p116 = scmp.ne.s32.totalorder %s99, %s115
      %p117 = scmp.eq.s32.totalorder %s27, 0
      %p118 = por %p116, %p117
      %s119 = ssub.s32 %s29, %s36
      %p120 = scmp.eq.s32.totalorder %s119, 0
      %s122 = sadd.s32 %s121, 1
      %s123 = scalar_select %p120, %s121, %s122
      %p126 = pneg %p120
      %p127 = scmp.eq.s32.totalorder %s21, 1
      %p128 = por %p126, %p127
      %p129 = scmp.ne.s32.totalorder %s121, %s124
      %p130 = scmp.eq.s32.totalorder %s21, 0
      %p131 = por %p129, %p130
      %p132 = scmp.ne.s32.totalorder %s121, %s124
      %p133 = scmp.eq.s32.totalorder %s26, 1
      %p134 = por %p132, %p133
      %p135 = scmp.ne.s32.totalorder %s124, %s125
      %p136 = scmp.eq.s32.totalorder %s26, 0
      %p137 = por %p135, %p136
      %p138 = scmp.ne.s32.totalorder %s124, %s125
      %p139 = scmp.eq.s32.totalorder %s27, 1
      %p140 = por %p138, %p139
      %p142 = scmp.ne.s32.totalorder %s125, %s141
      %p143 = scmp.eq.s32.totalorder %s27, 0
      %p144 = por %p142, %p143
      %s146 = sadd.s32 %s145, 1
      %p149 = scmp.eq.s32.totalorder %s21, 1
      %p150 = scmp.ne.s32.totalorder %s145, %s147
      %p151 = scmp.eq.s32.totalorder %s21, 0
      %p152 = por %p150, %p151
      %p153 = scmp.ne.s32.totalorder %s145, %s147
      %p154 = scmp.eq.s32.totalorder %s26, 1
      %p155 = por %p153, %p154
      %p156 = scmp.ne.s32.totalorder %s147, %s148
      %p157 = scmp.eq.s32.totalorder %s26, 0
      %p158 = por %p156, %p157
      %p159 = scmp.ne.s32.totalorder %s147, %s148
      %p160 = scmp.eq.s32.totalorder %s27, 1
      %p161 = por %p159, %p160
      %p163 = scmp.ne.s32.totalorder %s148, %s162
      %p164 = scmp.eq.s32.totalorder %s27, 0
      %p165 = por %p163, %p164
      %s167 = sadd.s32 %s166, 1
      %p170 = scmp.eq.s32.totalorder %s21, 1
      %p171 = scmp.ne.s32.totalorder %s166, %s168
      %p172 = scmp.eq.s32.totalorder %s21, 0
      %p173 = por %p171, %p172
      %p174 = scmp.ne.s32.totalorder %s166, %s168
      %p175 = scmp.eq.s32.totalorder %s26, 1
      %p176 = por %p174, %p175
      %p177 = scmp.ne.s32.totalorder %s168, %s169
      %p178 = scmp.eq.s32.totalorder %s26, 0
      %p179 = por %p177, %p178
      %p180 = scmp.ne.s32.totalorder %s168, %s169
      %p181 = scmp.eq.s32.totalorder %s27, 1
      %p182 = por %p180, %p181
      %p184 = scmp.ne.s32.totalorder %s169, %s183
      %p185 = scmp.eq.s32.totalorder %s27, 0
      %p186 = por %p184, %p185
      %s187 = ssub.s32 %s28, %s40
      %p188 = scmp.eq.s32.totalorder %s187, 0
      %s190 = sadd.s32 %s189, 1
      %s191 = scalar_select %p188, %s189, %s190
      %p194 = pneg %p188
      %p195 = scmp.eq.s32.totalorder %s21, 1
      %p196 = por %p194, %p195
      %p197 = scmp.ne.s32.totalorder %s189, %s192
      %p198 = scmp.eq.s32.totalorder %s21, 0
      %p199 = por %p197, %p198
      %p200 = scmp.ne.s32.totalorder %s189, %s192
      %p201 = scmp.eq.s32.totalorder %s26, 1
      %p202 = por %p200, %p201
      %p203 = scmp.ne.s32.totalorder %s192, %s193
      %p204 = scmp.eq.s32.totalorder %s26, 0
      %p205 = por %p203, %p204
      %p206 = scmp.ne.s32.totalorder %s192, %s193
      %p207 = scmp.eq.s32.totalorder %s27, 1
      %p208 = por %p206, %p207
      %p210 = scmp.ne.s32.totalorder %s193, %s209
      %p211 = scmp.eq.s32.totalorder %s27, 0
      %p212 = por %p210, %p211
      %p213 = scmp.le.s32.totalorder 1, %s21
      %p214 = scmp.lt.s32.totalorder %s21, 3
      %p215 = pnand %p213, %p214
      %p216 = pneg %p215
      // Predicated region
      $region9: #{tpu_custom_call.1} parent=5 // pred_check
        _
      $region10: #{tpu_custom_call.1} parent=5 // pred_check_branch
        %218 = sbr.rel (%p215) target = $region12
      $region11: #{tpu_custom_call.1} parent=5 // pred_region
        %s219 = ssub.s32 %s21, 1
        // Predicated region
        $region13: #{tpu_custom_call.1} parent=11 // pred_check
          %p220 = pneg %p59
        $region14: #{tpu_custom_call.1} parent=11 // pred_check_branch
          %222 = sbr.rel (%p220) target = $region16
        $region15: #{tpu_custom_call.1} parent=11 // pred_region
          %s224 = ssub.s32 512, 512
          %225 = vsyncadd [#allocation6], %s224
          %s226 = smul.addr %s30, 64
          %s227 = scalar_lea.hbm %s0, %s226
          %s228 = sshll.u32 [#allocation5], 4
          %s229 = int_to_ptr.vmem [resolvable:$true] %s228
          %234 = dma.hbm_to_vmem [thread:$0]  %s227, 512, %s229, [#allocation6], 64, 64, 4
        $region16: #{tpu_custom_call.1} parent=11 // pred_fallthru
          _
        // Predicated region
        $region17: #{tpu_custom_call.1} parent=11 // pred_check
          %p235 = pneg %p158
        $region18: #{tpu_custom_call.1} parent=11 // pred_check_branch
          %237 = sbr.rel (%p235) target = $region20
        $region19: #{tpu_custom_call.1} parent=11 // pred_region
          _
        $region20: #{tpu_custom_call.1} parent=11 // pred_fallthru
          _
        // Predicated region
        $region21: #{tpu_custom_call.1} parent=11 // pred_check
          %p238 = pneg %p179
        $region22: #{tpu_custom_call.1} parent=11 // pred_check_branch
          %240 = sbr.rel (%p238) target = $region24
        $region23: #{tpu_custom_call.1} parent=11 // pred_region
          _
        $region24: #{tpu_custom_call.1} parent=11 // pred_fallthru
          _
      $region12: #{tpu_custom_call.1} parent=5 // pred_fallthru
        _
      %p241 = scmp.lt.s32.totalorder %s21, 2
      // Predicated region
      $region25: #{tpu_custom_call.1} parent=5 // pred_check
        %p242 = pneg %p241
      $region26: #{tpu_custom_call.1} parent=5 // pred_check_branch
        %244 = sbr.rel (%p242) target = $region28
      $region27: #{tpu_custom_call.1} parent=5 // pred_region
        // Predicated region
        $region29: #{tpu_custom_call.1} parent=27 // pred_check
          %p245 = pneg %p79
        $region30: #{tpu_custom_call.1} parent=27 // pred_check_branch
          %247 = sbr.rel (%p245) target = $region32
        $region31: #{tpu_custom_call.1} parent=27 // pred_region
          %s248 = sand.u32 %s21, 1
          %s249 = scalar_lea.sflag [#allocation8], %s248
          %s250 = sand.u32 %s69, 1
          %s251 = smul.addr %s250, 256
          %s252 = scalar_lea.vmem [#allocation7], %s251
          %s254 = ssub.s32 4096, 4096
          %255 = vsyncadd %s249, %s254
          %s256 = smul.addr %s29, 64
          %s257 = smul.addr %s256, 64
          %s258 = scalar_lea.hbm %s1, %s257
          %s259 = sshll.u32 %s252, 4
          %s260 = int_to_ptr.vmem [resolvable:$true] %s259
          %265 = dma.hbm_to_vmem [thread:$0]  %s258, 4096, %s260, %s249, 256, 256, 16
        $region32: #{tpu_custom_call.1} parent=27 // pred_fallthru
          _
        // Predicated region
        $region33: #{tpu_custom_call.1} parent=27 // pred_check
          %p266 = pneg %p105
        $region34: #{tpu_custom_call.1} parent=27 // pred_check_branch
          %268 = sbr.rel (%p266) target = $region36
        $region35: #{tpu_custom_call.1} parent=27 // pred_region
          %s269 = sand.u32 %s21, 1
          %s270 = scalar_lea.sflag [#allocation8], %s269
          %s271 = sand.u32 %s95, 1
          %s272 = smul.addr %s271, 256
          %s273 = scalar_lea.vmem [#allocation9], %s272
          %s275 = ssub.s32 4096, 4096
          %276 = vsyncadd %s270, %s275
          %s277 = smul.addr %s29, 64
          %s278 = smul.addr %s277, 64
          %s279 = scalar_lea.hbm %s2, %s278
          %s280 = sshll.u32 %s273, 4
          %s281 = int_to_ptr.vmem [resolvable:$true] %s280
          %286 = dma.hbm_to_vmem [thread:$0]  %s279, 4096, %s281, %s270, 256, 256, 16
        $region36: #{tpu_custom_call.1} parent=27 // pred_fallthru
          _
        // Predicated region
        $region37: #{tpu_custom_call.1} parent=27 // pred_check
          %p287 = pneg %p131
        $region38: #{tpu_custom_call.1} parent=27 // pred_check_branch
          %289 = sbr.rel (%p287) target = $region40
        $region39: #{tpu_custom_call.1} parent=27 // pred_region
          %s290 = sand.u32 %s121, 1
          %s291 = scalar_lea.sflag [#allocation11], %s290
          %s292 = sand.u32 %s121, 1
          %s293 = smul.addr %s292, 4
          %s294 = scalar_lea.vmem [#allocation10], %s293
          %s296 = ssub.s32 64, 64
          %297 = vsyncadd %s291, %s296
          %s298 = smul.addr %s29, 4
          %s299 = smul.addr %s298, 16
          %s300 = scalar_lea.hbm %s3, %s299
          %s302 = sshll.u32 %s294, 4
          %s303 = int_to_ptr.vmem [resolvable:$true] %s302
          %305 = dma.hbm_to_vmem [thread:$0]  %s300, 64, %s303, %s291
        $region40: #{tpu_custom_call.1} parent=27 // pred_fallthru
          _
      $region28: #{tpu_custom_call.1} parent=5 // pred_fallthru
        _
      %p306 = scmp.le.s32.totalorder 1, %s21
      %p307 = scmp.lt.s32.totalorder %s21, 3
      %p308 = pnand %p306, %p307
      %p309 = pneg %p308
      // Predicated region
      $region41: #{tpu_custom_call.1} parent=5 // pred_check
        _
      $region42: #{tpu_custom_call.1} parent=5 // pred_check_branch
        %311 = sbr.rel (%p308) target = $region44
      $region43: #{tpu_custom_call.1} parent=5 // pred_region
        %s312 = ssub.s32 %s21, 1
        // Predicated region
        $region45: #{tpu_custom_call.1} parent=43 // pred_check
          %p313 = pneg %p59
        $region46: #{tpu_custom_call.1} parent=43 // pred_check_branch
          %315 = sbr.rel (%p313) target = $region48
        $region47: #{tpu_custom_call.1} parent=43 // pred_region
          %316 = dma.done [#allocation6], 512
        $region48: #{tpu_custom_call.1} parent=43 // pred_fallthru
          _
        %s317 = sand.u32 %s26, 1
        %s318 = scalar_lea.sflag [#allocation8], %s317
        %s319 = sand.u32 %s72, 1
        %s320 = smul.addr %s319, 256
        %s321 = scalar_lea.vmem [#allocation7], %s320
        // Predicated region
        $region49: #{tpu_custom_call.1} parent=43 // pred_check
          %p322 = pneg %p85
        $region50: #{tpu_custom_call.1} parent=43 // pred_check_branch
          %324 = sbr.rel (%p322) target = $region52
        $region51: #{tpu_custom_call.1} parent=43 // pred_region
          %325 = dma.done %s318, 4096
        $region52: #{tpu_custom_call.1} parent=43 // pred_fallthru
          _
        %s326 = sand.u32 %s26, 1
        %s327 = scalar_lea.sflag [#allocation8], %s326
        %s328 = sand.u32 %s98, 1
        %s329 = smul.addr %s328, 256
        %s330 = scalar_lea.vmem [#allocation9], %s329
        // Predicated region
        $region53: #{tpu_custom_call.1} parent=43 // pred_check
          %p331 = pneg %p111
        $region54: #{tpu_custom_call.1} parent=43 // pred_check_branch
          %333 = sbr.rel (%p331) target = $region56
        $region55: #{tpu_custom_call.1} parent=43 // pred_region
          %334 = dma.done %s327, 4096
        $region56: #{tpu_custom_call.1} parent=43 // pred_fallthru
          _
        %s335 = sand.u32 %s124, 1
        %s336 = scalar_lea.sflag [#allocation11], %s335
        %s337 = sand.u32 %s124, 1
        %s338 = smul.addr %s337, 4
        %s339 = scalar_lea.vmem [#allocation10], %s338
        // Predicated region
        $region57: #{tpu_custom_call.1} parent=43 // pred_check
          %p340 = pneg %p137
        $region58: #{tpu_custom_call.1} parent=43 // pred_check_branch
          %342 = sbr.rel (%p340) target = $region60
        $region59: #{tpu_custom_call.1} parent=43 // pred_region
          %343 = dma.done %s336, 64
        $region60: #{tpu_custom_call.1} parent=43 // pred_fallthru
          _
        %p344 = pneg %p59
        %p345 = pneg %p56
        %s346 = sand.u32 %s26, 1
        %s347 = scalar_lea.sflag [#allocation8], %s346
        %s348 = sand.u32 %s72, 1
        %s349 = smul.addr %s348, 256
        %s350 = scalar_lea.vmem [#allocation7], %s349
        %p351 = pneg %p85
        %p352 = pneg %p82
        %s353 = sand.u32 %s26, 1
        %s354 = scalar_lea.sflag [#allocation8], %s353
        %s355 = sand.u32 %s98, 1
        %s356 = smul.addr %s355, 256
        %s357 = scalar_lea.vmem [#allocation9], %s356
        %p358 = pneg %p111
        %p359 = pneg %p108
        %s360 = sand.u32 %s124, 1
        %s361 = scalar_lea.sflag [#allocation11], %s360
        %s362 = sand.u32 %s124, 1
        %s363 = smul.addr %s362, 4
        %s364 = scalar_lea.vmem [#allocation10], %s363
        %p365 = pneg %p137
        %p366 = pneg %p134
        %p367 = pneg %p158
        %p368 = pneg %p155
        %p369 = pneg %p179
        %p370 = pneg %p176
        %p371 = pneg %p205
        %p372 = pneg %p202
        %p373 = scmp.lt.s32.totalorder %s30, 0
        %s374 = scalar_select %p373, %s30, 0
        %s375 = smul.addr %s374, 8
        %s376 = scalar_lea.vmem %s6, %s375
        %p377 = scmp.lt.s32.totalorder %s30, 0
        %s378 = scalar_select %p377, %s30, 0
        %s379 = smul.addr %s378, 8
        %s380 = scalar_lea.vmem %s6, %s379
        %p382 = scmp.eq.s32.totalorder %s31, 0
        // Predicated region
        $region61: #{tpu_custom_call.1} parent=43 // pred_check
          %p383 = pneg %p382
        $region62: #{tpu_custom_call.1} parent=43 // pred_check_branch
          %385 = sbr.rel (%p383) target = $region64
        $region63: #{tpu_custom_call.1} parent=43 // pred_region
          %v386 = vld [vmem:[#allocation5] sm:$0xf]
          %v387 = vld [vmem:[#allocation5 + $0x4] sm:$0xf]
          %v388 = vld [vmem:[#allocation5 + $0x8] sm:$0xf]
          %v389 = vld [vmem:[#allocation5 + $0xc] sm:$0xf]
          %v390 = vld [vmem:[#allocation5 + $0x10] sm:$0xf]
          %v391 = vld [vmem:[#allocation5 + $0x14] sm:$0xf]
          %v392 = vld [vmem:[#allocation5 + $0x18] sm:$0xf]
          %v393 = vld [vmem:[#allocation5 + $0x1c] sm:$0xf]
          %394 = vst [vmem:[#allocation3] sm:$0xf] %v386
          %395 = vst [vmem:[#allocation3 + $0x4] sm:$0xf] %v387
          %396 = vst [vmem:[#allocation3 + $0x8] sm:$0xf] %v388
          %397 = vst [vmem:[#allocation3 + $0xc] sm:$0xf] %v389
          %398 = vst [vmem:[#allocation3 + $0x10] sm:$0xf] %v390
          %399 = vst [vmem:[#allocation3 + $0x14] sm:$0xf] %v391
          %400 = vst [vmem:[#allocation3 + $0x18] sm:$0xf] %v392
          %401 = vst [vmem:[#allocation3 + $0x1c] sm:$0xf] %v393
        $region64: #{tpu_custom_call.1} parent=43 // pred_fallthru
          _
        %v402 = vld [vmem:[%s321] sm:$0xff]
        %v403 = vld [vmem:[%s321 + $0x8] sm:$0xff]
        %v404 = vld [vmem:[%s321 + $0x10] sm:$0xff]
        %v405 = vld [vmem:[%s321 + $0x18] sm:$0xff]
        %v406 = vld [vmem:[%s321 + $0x20] sm:$0xff]
        %v407 = vld [vmem:[%s321 + $0x28] sm:$0xff]
        %v408 = vld [vmem:[%s321 + $0x30] sm:$0xff]
        %v409 = vld [vmem:[%s321 + $0x38] sm:$0xff]
        %v410 = vld [vmem:[%s321 + $0x40] sm:$0xff]
        %v411 = vld [vmem:[%s321 + $0x48] sm:$0xff]
        %v412 = vld [vmem:[%s321 + $0x50] sm:$0xff]
        %v413 = vld [vmem:[%s321 + $0x58] sm:$0xff]
        %v414 = vld [vmem:[%s321 + $0x60] sm:$0xff]
        %v415 = vld [vmem:[%s321 + $0x68] sm:$0xff]
        %v416 = vld [vmem:[%s321 + $0x70] sm:$0xff]
        %v417 = vld [vmem:[%s321 + $0x78] sm:$0xff]
        %v418 = vld [vmem:[%s321 + $0x80] sm:$0xff]
        %v419 = vld [vmem:[%s321 + $0x88] sm:$0xff]
        %v420 = vld [vmem:[%s321 + $0x90] sm:$0xff]
        %v421 = vld [vmem:[%s321 + $0x98] sm:$0xff]
        %v422 = vld [vmem:[%s321 + $0xa0] sm:$0xff]
        %v423 = vld [vmem:[%s321 + $0xa8] sm:$0xff]
        %v424 = vld [vmem:[%s321 + $0xb0] sm:$0xff]
        %v425 = vld [vmem:[%s321 + $0xb8] sm:$0xff]
        %v426 = vld [vmem:[%s321 + $0xc0] sm:$0xff]
        %v427 = vld [vmem:[%s321 + $0xc8] sm:$0xff]
        %v428 = vld [vmem:[%s321 + $0xd0] sm:$0xff]
        %v429 = vld [vmem:[%s321 + $0xd8] sm:$0xff]
        %v430 = vld [vmem:[%s321 + $0xe0] sm:$0xff]
        %v431 = vld [vmem:[%s321 + $0xe8] sm:$0xff]
        %v432 = vld [vmem:[%s321 + $0xf0] sm:$0xff]
        %v433 = vld [vmem:[%s321 + $0xf8] sm:$0xff]
        %v434 = vld [vmem:[%s330] sm:$0xff]
        %v435 = vld [vmem:[%s330 + $0x8] sm:$0xff]
        %v436 = vld [vmem:[%s330 + $0x10] sm:$0xff]
        %v437 = vld [vmem:[%s330 + $0x18] sm:$0xff]
        %v438 = vld [vmem:[%s330 + $0x20] sm:$0xff]
        %v439 = vld [vmem:[%s330 + $0x28] sm:$0xff]
        %v440 = vld [vmem:[%s330 + $0x30] sm:$0xff]
        %v441 = vld [vmem:[%s330 + $0x38] sm:$0xff]
        %v442 = vld [vmem:[%s330 + $0x40] sm:$0xff]
        %v443 = vld [vmem:[%s330 + $0x48] sm:$0xff]
        %v444 = vld [vmem:[%s330 + $0x50] sm:$0xff]
        %v445 = vld [vmem:[%s330 + $0x58] sm:$0xff]
        %v446 = vld [vmem:[%s330 + $0x60] sm:$0xff]
        %v447 = vld [vmem:[%s330 + $0x68] sm:$0xff]
        %v448 = vld [vmem:[%s330 + $0x70] sm:$0xff]
        %v449 = vld [vmem:[%s330 + $0x78] sm:$0xff]
        %v450 = vld [vmem:[%s330 + $0x80] sm:$0xff]
        %v451 = vld [vmem:[%s330 + $0x88] sm:$0xff]
        %v452 = vld [vmem:[%s330 + $0x90] sm:$0xff]
        %v453 = vld [vmem:[%s330 + $0x98] sm:$0xff]
        %v454 = vld [vmem:[%s330 + $0xa0] sm:$0xff]
        %v455 = vld [vmem:[%s330 + $0xa8] sm:$0xff]
        %v456 = vld [vmem:[%s330 + $0xb0] sm:$0xff]
        %v457 = vld [vmem:[%s330 + $0xb8] sm:$0xff]
        %v458 = vld [vmem:[%s330 + $0xc0] sm:$0xff]
        %v459 = vld [vmem:[%s330 + $0xc8] sm:$0xff]
        %v460 = vld [vmem:[%s330 + $0xd0] sm:$0xff]
        %v461 = vld [vmem:[%s330 + $0xd8] sm:$0xff]
        %v462 = vld [vmem:[%s330 + $0xe0] sm:$0xff]
        %v463 = vld [vmem:[%s330 + $0xe8] sm:$0xff]
        %v464 = vld [vmem:[%s330 + $0xf0] sm:$0xff]
        %v465 = vld [vmem:[%s330 + $0xf8] sm:$0xff]
        %v466 = vld [vmem:[%s339] sm:$0xf]
        %v467 = vld [vmem:[#allocation3] sm:$0xf]
        %v468 = vld [vmem:[#allocation3 + $0x4] sm:$0xf]
        %v469 = vld [vmem:[#allocation3 + $0x8] sm:$0xf]
        %v470 = vld [vmem:[#allocation3 + $0xc] sm:$0xf]
        %v471 = vld [vmem:[#allocation3 + $0x10] sm:$0xf]
        %v472 = vld [vmem:[#allocation3 + $0x14] sm:$0xf]
        %v473 = vld [vmem:[#allocation3 + $0x18] sm:$0xf]
        %v474 = vld [vmem:[#allocation3 + $0x1c] sm:$0xf]
        %v483 = vunpack.c.l.b16 %v467
        %v484 = vunpack.c.l.b16 %v468
        %v485 = vunpack.c.l.b16 %v469
        %v486 = vunpack.c.l.b16 %v470
        %v487 = vunpack.c.l.b16 %v471
        %v488 = vunpack.c.l.b16 %v472
        %v489 = vunpack.c.l.b16 %v473
        %v490 = vunpack.c.l.b16 %v474
        %v491 = vpack.c.b16 %v484, %v483
        %v492 = vpack.c.b16 %v486, %v485
        %v493 = vpack.c.b16 %v488, %v487
        %v494 = vpack.c.b16 %v490, %v489
        %v531 = vunpack.c.l.b16 %v402
        %v532 = vunpack.c.h.b16 %v402
        %v533 = vunpack.c.l.b16 %v403
        %v534 = vunpack.c.h.b16 %v403
        %v535 = vunpack.c.l.b16 %v404
        %v536 = vunpack.c.h.b16 %v404
        %v537 = vunpack.c.l.b16 %v405
        %v538 = vunpack.c.h.b16 %v405
        %v539 = vunpack.c.l.b16 %v406
        %v540 = vunpack.c.h.b16 %v406
        %v541 = vunpack.c.l.b16 %v407
        %v542 = vunpack.c.h.b16 %v407
        %v543 = vunpack.c.l.b16 %v408
        %v544 = vunpack.c.h.b16 %v408
        %v545 = vunpack.c.l.b16 %v409
        %v546 = vunpack.c.h.b16 %v409
        %v547 = vunpack.c.l.b16 %v410
        %v548 = vunpack.c.h.b16 %v410
        %v549 = vunpack.c.l.b16 %v411
        %v550 = vunpack.c.h.b16 %v411
        %v551 = vunpack.c.l.b16 %v412
        %v552 = vunpack.c.h.b16 %v412
        %v553 = vunpack.c.l.b16 %v413
        %v554 = vunpack.c.h.b16 %v413
        %v555 = vunpack.c.l.b16 %v414
        %v556 = vunpack.c.h.b16 %v414
        %v557 = vunpack.c.l.b16 %v415
        %v558 = vunpack.c.h.b16 %v415
        %v559 = vunpack.c.l.b16 %v416
        %v560 = vunpack.c.h.b16 %v416
        %v561 = vunpack.c.l.b16 %v417
        %v562 = vunpack.c.h.b16 %v417
        %v563 = vunpack.c.l.b16 %v418
        %v564 = vunpack.c.h.b16 %v418
        %v565 = vunpack.c.l.b16 %v419
        %v566 = vunpack.c.h.b16 %v419
        %v567 = vunpack.c.l.b16 %v420
        %v568 = vunpack.c.h.b16 %v420
        %v569 = vunpack.c.l.b16 %v421
        %v570 = vunpack.c.h.b16 %v421
        %v571 = vunpack.c.l.b16 %v422
        %v572 = vunpack.c.h.b16 %v422
        %v573 = vunpack.c.l.b16 %v423
        %v574 = vunpack.c.h.b16 %v423
        %v575 = vunpack.c.l.b16 %v424
        %v576 = vunpack.c.h.b16 %v424
        %v577 = vunpack.c.l.b16 %v425
        %v578 = vunpack.c.h.b16 %v425
        %v579 = vunpack.c.l.b16 %v426
        %v580 = vunpack.c.h.b16 %v426
        %v581 = vunpack.c.l.b16 %v427
        %v582 = vunpack.c.h.b16 %v427
        %v583 = vunpack.c.l.b16 %v428
        %v584 = vunpack.c.h.b16 %v428
        %v585 = vunpack.c.l.b16 %v429
        %v586 = vunpack.c.h.b16 %v429
        %v587 = vunpack.c.l.b16 %v430
        %v588 = vunpack.c.h.b16 %v430
        %v589 = vunpack.c.l.b16 %v431
        %v590 = vunpack.c.h.b16 %v431
        %v591 = vunpack.c.l.b16 %v432
        %v592 = vunpack.c.h.b16 %v432
        %v593 = vunpack.c.l.b16 %v433
        %v594 = vunpack.c.h.b16 %v433
        %v595 = vpack.c.b16 %v535, %v531
        %v596 = vpack.c.b16 %v536, %v532
        %v597 = vpack.c.b16 %v537, %v533
        %v598 = vpack.c.b16 %v538, %v534
        %v599 = vpack.c.b16 %v543, %v539
        %v600 = vpack.c.b16 %v544, %v540
        %v601 = vpack.c.b16 %v545, %v541
        %v602 = vpack.c.b16 %v546, %v542
        %v603 = vpack.c.b16 %v551, %v547
        %v604 = vpack.c.b16 %v552, %v548
        %v605 = vpack.c.b16 %v553, %v549
        %v606 = vpack.c.b16 %v554, %v550
        %v607 = vpack.c.b16 %v559, %v555
        %v608 = vpack.c.b16 %v560, %v556
        %v609 = vpack.c.b16 %v561, %v557
        %v610 = vpack.c.b16 %v562, %v558
        %v611 = vpack.c.b16 %v567, %v563
        %v612 = vpack.c.b16 %v568, %v564
        %v613 = vpack.c.b16 %v569, %v565
        %v614 = vpack.c.b16 %v570, %v566
        %v615 = vpack.c.b16 %v575, %v571
        %v616 = vpack.c.b16 %v576, %v572
        %v617 = vpack.c.b16 %v577, %v573
        %v618 = vpack.c.b16 %v578, %v574
        %v619 = vpack.c.b16 %v583, %v579
        %v620 = vpack.c.b16 %v584, %v580
        %v621 = vpack.c.b16 %v585, %v581
        %v622 = vpack.c.b16 %v586, %v582
        %v623 = vpack.c.b16 %v591, %v587
        %v624 = vpack.c.b16 %v592, %v588
        %v625 = vpack.c.b16 %v593, %v589
        %v626 = vpack.c.b16 %v594, %v590
        %659 = vmatprep.subr.bf16.mxu0 %v624
        %660 = vmatpush1.bf16.msra.mxu0 %v623
        %661 = vmatprep.subr.bf16.mxu0 %v620
        %662 = vmatpush1.bf16.msra.mxu0 %v619
        %663 = vmatprep.subr.bf16.mxu0 %v616
        %664 = vmatpush1.bf16.msra.mxu0 %v615
        %665 = vmatprep.subr.bf16.mxu0 %v612
        %666 = vmatpush1.bf16.msra.mxu0 %v611
        %667 = vmatprep.subr.bf16.mxu0 %v608
        %668 = vmatpush1.bf16.msra.mxu0 %v607
        %669 = vmatprep.subr.bf16.mxu0 %v604
        %670 = vmatpush1.bf16.msra.mxu0 %v603
        %671 = vmatprep.subr.bf16.mxu0 %v600
        %672 = vmatpush1.bf16.msra.mxu0 %v599
        %673 = vmatprep.subr.bf16.mxu0 %v596
        %674 = vmatpush1.bf16.msra.mxu0 %v595
        %675 = vmatprep.subr.bf16.mxu0 0
        %676 = vmatpush2.bf16.msra.mxu0 0
        %677 = vmatprep.subr.bf16.mxu0 0
        %678 = vmatpush2.bf16.msra.mxu0 0
        %679 = vmatprep.subr.bf16.mxu0 0
        %680 = vmatpush2.bf16.msra.mxu0 0
        %681 = vmatprep.subr.bf16.mxu0 0
        %682 = vmatpush2.bf16.msra.mxu0 0
        %683 = vmatprep.subr.bf16.mxu0 0
        %684 = vmatpush2.bf16.msra.mxu0 0
        %685 = vmatprep.subr.bf16.mxu0 0
        %686 = vmatpush2.bf16.msra.mxu0 0
        %687 = vmatprep.subr.bf16.mxu0 0
        %688 = vmatpush2.bf16.msra.mxu0 0
        %689 = vmatprep.subr.bf16.mxu0 0
        %690 = vmatpush2.bf16.msra.mxu0 0
        %691 = vmatprep.mubr.bf16.mxu0 0
        %692 = vmatmul.mubr.bf16.gmra.mxu0 %v491
        %v693 = vpop.f32.mrf.mxu0
        %v694 = vadd.f32 0.0, %v693
        %v695 = vpop.f32.mrf.mxu0
        %v696 = vadd.f32 0.0, %v695
        %v697 = vpop.f32.mrf.mxu0
        %v698 = vadd.f32 0.0, %v697
        %v699 = vpop.f32.mrf.mxu0
        %v700 = vadd.f32 0.0, %v699
        %701 = vmatprep.mubr.bf16.mxu0 0
        %702 = vmatmul.mubr.bf16.gmra.mxu0 %v492
        %v703 = vpop.f32.mrf.mxu0
        %v704 = vadd.f32 0.0, %v703
        %v705 = vpop.f32.mrf.mxu0
        %v706 = vadd.f32 0.0, %v705
        %v707 = vpop.f32.mrf.mxu0
        %v708 = vadd.f32 0.0, %v707
        %v709 = vpop.f32.mrf.mxu0
        %v710 = vadd.f32 0.0, %v709
        %711 = vmatprep.mubr.bf16.mxu0 0
        %712 = vmatmul.mubr.bf16.gmra.mxu0 %v493
        %v713 = vpop.f32.mrf.mxu0
        %v714 = vadd.f32 0.0, %v713
        %v715 = vpop.f32.mrf.mxu0
        %v716 = vadd.f32 0.0, %v715
        %v717 = vpop.f32.mrf.mxu0
        %v718 = vadd.f32 0.0, %v717
        %v719 = vpop.f32.mrf.mxu0
        %v720 = vadd.f32 0.0, %v719
        %721 = vmatprep.mubr.bf16.mxu0 0
        %722 = vmatmul.mubr.bf16.gmra.mxu0 %v494
        %v723 = vpop.f32.mrf.mxu0
        %v724 = vadd.f32 0.0, %v723
        %v725 = vpop.f32.mrf.mxu0
        %v726 = vadd.f32 0.0, %v725
        %v727 = vpop.f32.mrf.mxu0
        %v728 = vadd.f32 0.0, %v727
        %v729 = vpop.f32.mrf.mxu0
        %v730 = vadd.f32 0.0, %v729
        %731 = vdwg.mxu0
        %732 = vmatprep.subr.bf16.mxu0 %v626
        %733 = vmatpush1.bf16.msra.mxu0 %v625
        %734 = vmatprep.subr.bf16.mxu0 %v622
        %735 = vmatpush1.bf16.msra.mxu0 %v621
        %736 = vmatprep.subr.bf16.mxu0 %v618
        %737 = vmatpush1.bf16.msra.mxu0 %v617
        %738 = vmatprep.subr.bf16.mxu0 %v614
        %739 = vmatpush1.bf16.msra.mxu0 %v613
        %740 = vmatprep.subr.bf16.mxu0 %v610
        %741 = vmatpush1.bf16.msra.mxu0 %v609
        %742 = vmatprep.subr.bf16.mxu0 %v606
        %743 = vmatpush1.bf16.msra.mxu0 %v605
        %744 = vmatprep.subr.bf16.mxu0 %v602
        %745 = vmatpush1.bf16.msra.mxu0 %v601
        %746 = vmatprep.subr.bf16.mxu0 %v598
        %747 = vmatpush1.bf16.msra.mxu0 %v597
        %748 = vmatprep.subr.bf16.mxu0 0
        %749 = vmatpush2.bf16.msra.mxu0 0
        %750 = vmatprep.subr.bf16.mxu0 0
        %751 = vmatpush2.bf16.msra.mxu0 0
        %752 = vmatprep.subr.bf16.mxu0 0
        %753 = vmatpush2.bf16.msra.mxu0 0
        %754 = vmatprep.subr.bf16.mxu0 0
        %755 = vmatpush2.bf16.msra.mxu0 0
        %756 = vmatprep.subr.bf16.mxu0 0
        %757 = vmatpush2.bf16.msra.mxu0 0
        %758 = vmatprep.subr.bf16.mxu0 0
        %759 = vmatpush2.bf16.msra.mxu0 0
        %760 = vmatprep.subr.bf16.mxu0 0
        %761 = vmatpush2.bf16.msra.mxu0 0
        %762 = vmatprep.subr.bf16.mxu0 0
        %763 = vmatpush2.bf16.msra.mxu0 0
        %764 = vmatprep.mubr.bf16.mxu0 0
        %765 = vmatmul.mubr.bf16.gmra.mxu0 %v491
        %v766 = vpop.f32.mrf.mxu0
        %v767 = vadd.f32 0.0, %v766
        %v768 = vpop.f32.mrf.mxu0
        %v769 = vadd.f32 0.0, %v768
        %v770 = vpop.f32.mrf.mxu0
        %v771 = vadd.f32 0.0, %v770
        %v772 = vpop.f32.mrf.mxu0
        %v773 = vadd.f32 0.0, %v772
        %774 = vmatprep.mubr.bf16.mxu0 0
        %775 = vmatmul.mubr.bf16.gmra.mxu0 %v492
        %v776 = vpop.f32.mrf.mxu0
        %v777 = vadd.f32 0.0, %v776
        %v778 = vpop.f32.mrf.mxu0
        %v779 = vadd.f32 0.0, %v778
        %v780 = vpop.f32.mrf.mxu0
        %v781 = vadd.f32 0.0, %v780
        %v782 = vpop.f32.mrf.mxu0
        %v783 = vadd.f32 0.0, %v782
        %784 = vmatprep.mubr.bf16.mxu0 0
        %785 = vmatmul.mubr.bf16.gmra.mxu0 %v493
        %v786 = vpop.f32.mrf.mxu0
        %v787 = vadd.f32 0.0, %v786
        %v788 = vpop.f32.mrf.mxu0
        %v789 = vadd.f32 0.0, %v788
        %v790 = vpop.f32.mrf.mxu0
        %v791 = vadd.f32 0.0, %v790
        %v792 = vpop.f32.mrf.mxu0
        %v793 = vadd.f32 0.0, %v792
        %794 = vmatprep.mubr.bf16.mxu0 0
        %795 = vmatmul.mubr.bf16.gmra.mxu0 %v494
        %v796 = vpop.f32.mrf.mxu0
        %v797 = vadd.f32 0.0, %v796
        %v798 = vpop.f32.mrf.mxu0
        %v799 = vadd.f32 0.0, %v798
        %v800 = vpop.f32.mrf.mxu0
        %v801 = vadd.f32 0.0, %v800
        %v802 = vpop.f32.mrf.mxu0
        %v803 = vadd.f32 0.0, %v802
        %804 = vdwg.mxu0
        %805 = vst [vmem:[#allocation2] sm:$0xff] %v694
        %806 = vst [vmem:[#allocation2 + $0x8] sm:$0xff] %v696
        %807 = vst [vmem:[#allocation2 + $0x10] sm:$0xff] %v767
        %808 = vst [vmem:[#allocation2 + $0x18] sm:$0xff] %v769
        %809 = vst [vmem:[#allocation2 + $0x20] sm:$0xff] %v698
        %810 = vst [vmem:[#allocation2 + $0x28] sm:$0xff] %v700
        %811 = vst [vmem:[#allocation2 + $0x30] sm:$0xff] %v771
        %812 = vst [vmem:[#allocation2 + $0x38] sm:$0xff] %v773
        %813 = vst [vmem:[#allocation2 + $0x40] sm:$0xff] %v704
        %814 = vst [vmem:[#allocation2 + $0x48] sm:$0xff] %v706
        %815 = vst [vmem:[#allocation2 + $0x50] sm:$0xff] %v777
        %816 = vst [vmem:[#allocation2 + $0x58] sm:$0xff] %v779
        %817 = vst [vmem:[#allocation2 + $0x60] sm:$0xff] %v708
        %818 = vst [vmem:[#allocation2 + $0x68] sm:$0xff] %v710
        %819 = vst [vmem:[#allocation2 + $0x70] sm:$0xff] %v781
        %820 = vst [vmem:[#allocation2 + $0x78] sm:$0xff] %v783
        %821 = vst [vmem:[#allocation2 + $0x80] sm:$0xff] %v714
        %822 = vst [vmem:[#allocation2 + $0x88] sm:$0xff] %v716
        %823 = vst [vmem:[#allocation2 + $0x90] sm:$0xff] %v787
        %824 = vst [vmem:[#allocation2 + $0x98] sm:$0xff] %v789
        %825 = vst [vmem:[#allocation2 + $0xa0] sm:$0xff] %v718
        %826 = vst [vmem:[#allocation2 + $0xa8] sm:$0xff] %v720
        %827 = vst [vmem:[#allocation2 + $0xb0] sm:$0xff] %v791
        %828 = vst [vmem:[#allocation2 + $0xb8] sm:$0xff] %v793
        %829 = vst [vmem:[#allocation2 + $0xc0] sm:$0xff] %v724
        %830 = vst [vmem:[#allocation2 + $0xc8] sm:$0xff] %v726
        %831 = vst [vmem:[#allocation2 + $0xd0] sm:$0xff] %v797
        %832 = vst [vmem:[#allocation2 + $0xd8] sm:$0xff] %v799
        %833 = vst [vmem:[#allocation2 + $0xe0] sm:$0xff] %v728
        %834 = vst [vmem:[#allocation2 + $0xe8] sm:$0xff] %v730
        %835 = vst [vmem:[#allocation2 + $0xf0] sm:$0xff] %v801
        %836 = vst [vmem:[#allocation2 + $0xf8] sm:$0xff] %v803
        %v837 = vld [vmem:[#allocation2] sm:$0xff]
        %v838 = vld [vmem:[#allocation2 + $0x8] sm:$0xff]
        %v839 = vld [vmem:[#allocation2 + $0x10] sm:$0xff]
        %v840 = vld [vmem:[#allocation2 + $0x18] sm:$0xff]
        %v873 = vunpack.c.l.b16 %v434
        %v874 = vunpack.c.h.b16 %v434
        %v875 = vunpack.c.l.b16 %v435
        %v876 = vunpack.c.h.b16 %v435
        %v877 = vunpack.c.l.b16 %v436
        %v878 = vunpack.c.h.b16 %v436
        %v879 = vunpack.c.l.b16 %v437
        %v880 = vunpack.c.h.b16 %v437
        %v881 = vunpack.c.l.b16 %v438
        %v882 = vunpack.c.h.b16 %v438
        %v883 = vunpack.c.l.b16 %v439
        %v884 = vunpack.c.h.b16 %v439
        %v885 = vunpack.c.l.b16 %v440
        %v886 = vunpack.c.h.b16 %v440
        %v887 = vunpack.c.l.b16 %v441
        %v888 = vunpack.c.h.b16 %v441
        %v889 = vunpack.c.l.b16 %v442
        %v890 = vunpack.c.h.b16 %v442
        %v891 = vunpack.c.l.b16 %v443
        %v892 = vunpack.c.h.b16 %v443
        %v893 = vunpack.c.l.b16 %v444
        %v894 = vunpack.c.h.b16 %v444
        %v895 = vunpack.c.l.b16 %v445
        %v896 = vunpack.c.h.b16 %v445
        %v897 = vunpack.c.l.b16 %v446
        %v898 = vunpack.c.h.b16 %v446
        %v899 = vunpack.c.l.b16 %v447
        %v900 = vunpack.c.h.b16 %v447
        %v901 = vunpack.c.l.b16 %v448
        %v902 = vunpack.c.h.b16 %v448
        %v903 = vunpack.c.l.b16 %v449
        %v904 = vunpack.c.h.b16 %v449
        %v905 = vunpack.c.l.b16 %v450
        %v906 = vunpack.c.h.b16 %v450
        %v907 = vunpack.c.l.b16 %v451
        %v908 = vunpack.c.h.b16 %v451
        %v909 = vunpack.c.l.b16 %v452
        %v910 = vunpack.c.h.b16 %v452
        %v911 = vunpack.c.l.b16 %v453
        %v912 = vunpack.c.h.b16 %v453
        %v913 = vunpack.c.l.b16 %v454
        %v914 = vunpack.c.h.b16 %v454
        %v915 = vunpack.c.l.b16 %v455
        %v916 = vunpack.c.h.b16 %v455
        %v917 = vunpack.c.l.b16 %v456
        %v918 = vunpack.c.h.b16 %v456
        %v919 = vunpack.c.l.b16 %v457
        %v920 = vunpack.c.h.b16 %v457
        %v921 = vunpack.c.l.b16 %v458
        %v922 = vunpack.c.h.b16 %v458
        %v923 = vunpack.c.l.b16 %v459
        %v924 = vunpack.c.h.b16 %v459
        %v925 = vunpack.c.l.b16 %v460
        %v926 = vunpack.c.h.b16 %v460
        %v927 = vunpack.c.l.b16 %v461
        %v928 = vunpack.c.h.b16 %v461
        %v929 = vunpack.c.l.b16 %v462
        %v930 = vunpack.c.h.b16 %v462
        %v931 = vunpack.c.l.b16 %v463
        %v932 = vunpack.c.h.b16 %v463
        %v933 = vunpack.c.l.b16 %v464
        %v934 = vunpack.c.h.b16 %v464
        %v935 = vunpack.c.l.b16 %v465
        %v936 = vunpack.c.h.b16 %v465
        %v937 = vpack.c.b16 %v877, %v873
        %v938 = vpack.c.b16 %v878, %v874
        %v939 = vpack.c.b16 %v879, %v875
        %v940 = vpack.c.b16 %v880, %v876
        %v941 = vpack.c.b16 %v885, %v881
        %v942 = vpack.c.b16 %v886, %v882
        %v943 = vpack.c.b16 %v887, %v883
        %v944 = vpack.c.b16 %v888, %v884
        %v945 = vpack.c.b16 %v893, %v889
        %v946 = vpack.c.b16 %v894, %v890
        %v947 = vpack.c.b16 %v895, %v891
        %v948 = vpack.c.b16 %v896, %v892
        %v949 = vpack.c.b16 %v901, %v897
        %v950 = vpack.c.b16 %v902, %v898
        %v951 = vpack.c.b16 %v903, %v899
        %v952 = vpack.c.b16 %v904, %v900
        %v953 = vpack.c.b16 %v909, %v905
        %v954 = vpack.c.b16 %v910, %v906
        %v955 = vpack.c.b16 %v911, %v907
        %v956 = vpack.c.b16 %v912, %v908
        %v957 = vpack.c.b16 %v917, %v913
        %v958 = vpack.c.b16 %v918, %v914
        %v959 = vpack.c.b16 %v919, %v915
        %v960 = vpack.c.b16 %v920, %v916
        %v961 = vpack.c.b16 %v925, %v921
        %v962 = vpack.c.b16 %v926, %v922
        %v963 = vpack.c.b16 %v927, %v923
        %v964 = vpack.c.b16 %v928, %v924
        %v965 = vpack.c.b16 %v933, %v929
        %v966 = vpack.c.b16 %v934, %v930
        %v967 = vpack.c.b16 %v935, %v931
        %v968 = vpack.c.b16 %v936, %v932
        %1001 = vmatprep.subr.bf16.mxu0 %v966
        %1002 = vmatpush1.bf16.msra.mxu0 %v965
        %1003 = vmatprep.subr.bf16.mxu0 %v962
        %1004 = vmatpush1.bf16.msra.mxu0 %v961
        %1005 = vmatprep.subr.bf16.mxu0 %v958
        %1006 = vmatpush1.bf16.msra.mxu0 %v957
        %1007 = vmatprep.subr.bf16.mxu0 %v954
        %1008 = vmatpush1.bf16.msra.mxu0 %v953
        %1009 = vmatprep.subr.bf16.mxu0 %v950
        %1010 = vmatpush1.bf16.msra.mxu0 %v949
        %1011 = vmatprep.subr.bf16.mxu0 %v946
        %1012 = vmatpush1.bf16.msra.mxu0 %v945
        %1013 = vmatprep.subr.bf16.mxu0 %v942
        %1014 = vmatpush1.bf16.msra.mxu0 %v941
        %1015 = vmatprep.subr.bf16.mxu0 %v938
        %1016 = vmatpush1.bf16.msra.mxu0 %v937
        %1017 = vmatprep.subr.bf16.mxu0 0
        %1018 = vmatpush2.bf16.msra.mxu0 0
        %1019 = vmatprep.subr.bf16.mxu0 0
        %1020 = vmatpush2.bf16.msra.mxu0 0
        %1021 = vmatprep.subr.bf16.mxu0 0
        %1022 = vmatpush2.bf16.msra.mxu0 0
        %1023 = vmatprep.subr.bf16.mxu0 0
        %1024 = vmatpush2.bf16.msra.mxu0 0
        %1025 = vmatprep.subr.bf16.mxu0 0
        %1026 = vmatpush2.bf16.msra.mxu0 0
        %1027 = vmatprep.subr.bf16.mxu0 0
        %1028 = vmatpush2.bf16.msra.mxu0 0
        %1029 = vmatprep.subr.bf16.mxu0 0
        %1030 = vmatpush2.bf16.msra.mxu0 0
        %1031 = vmatprep.subr.bf16.mxu0 0
        %1032 = vmatpush2.bf16.msra.mxu0 0
        %1033 = vmatprep.mubr.bf16.mxu0 0
        %1034 = vmatmul.mubr.bf16.gmra.mxu0 0
        %v1035 = vpop.f32.mrf.mxu0
        %v1036 = vadd.f32 0.0, %v1035
        %v1037 = vpop.f32.mrf.mxu0
        %v1038 = vadd.f32 0.0, %v1037
        %v1039 = vpop.f32.mrf.mxu0
        %v1040 = vpop.f32.mrf.mxu0
        %1041 = vdwg.mxu0
        %1042 = vmatprep.subr.bf16.mxu0 %v968
        %1043 = vmatpush1.bf16.msra.mxu0 %v967
        %1044 = vmatprep.subr.bf16.mxu0 %v964
        %1045 = vmatpush1.bf16.msra.mxu0 %v963
        %1046 = vmatprep.subr.bf16.mxu0 %v960
        %1047 = vmatpush1.bf16.msra.mxu0 %v959
        %1048 = vmatprep.subr.bf16.mxu0 %v956
        %1049 = vmatpush1.bf16.msra.mxu0 %v955
        %1050 = vmatprep.subr.bf16.mxu0 %v952
        %1051 = vmatpush1.bf16.msra.mxu0 %v951
        %1052 = vmatprep.subr.bf16.mxu0 %v948
        %1053 = vmatpush1.bf16.msra.mxu0 %v947
        %1054 = vmatprep.subr.bf16.mxu0 %v944
        %1055 = vmatpush1.bf16.msra.mxu0 %v943
        %1056 = vmatprep.subr.bf16.mxu0 %v940
        %1057 = vmatpush1.bf16.msra.mxu0 %v939
        %1058 = vmatprep.subr.bf16.mxu0 0
        %1059 = vmatpush2.bf16.msra.mxu0 0
        %1060 = vmatprep.subr.bf16.mxu0 0
        %1061 = vmatpush2.bf16.msra.mxu0 0
        %1062 = vmatprep.subr.bf16.mxu0 0
        %1063 = vmatpush2.bf16.msra.mxu0 0
        %1064 = vmatprep.subr.bf16.mxu0 0
        %1065 = vmatpush2.bf16.msra.mxu0 0
        %1066 = vmatprep.subr.bf16.mxu0 0
        %1067 = vmatpush2.bf16.msra.mxu0 0
        %1068 = vmatprep.subr.bf16.mxu0 0
        %1069 = vmatpush2.bf16.msra.mxu0 0
        %1070 = vmatprep.subr.bf16.mxu0 0
        %1071 = vmatpush2.bf16.msra.mxu0 0
        %1072 = vmatprep.subr.bf16.mxu0 0
        %1073 = vmatpush2.bf16.msra.mxu0 0
        %1074 = vmatprep.mubr.bf16.mxu0 0
        %1075 = vmatmul.mubr.bf16.gmra.mxu0 0
        %v1076 = vpop.f32.mrf.mxu0
        %v1077 = vadd.f32 0.0, %v1076
        %v1078 = vpop.f32.mrf.mxu0
        %v1079 = vadd.f32 0.0, %v1078
        %v1080 = vpop.f32.mrf.mxu0
        %v1081 = vpop.f32.mrf.mxu0
        %1082 = vdwg.mxu0
        %v1083 = vadd.f32 %v837, %v1036
        %v1084 = vadd.f32 %v838, %v1038
        %v1085 = vadd.f32 %v839, %v1077
        %v1086 = vadd.f32 %v840, %v1079
        %v1088 = vlaneseq
        %v1089 = vshrl.u32 %v1088, 7
        %v1090 = vsub.s32 0, %v1089
        %v1091 = vrot.slane %v466, %v1090
        %v1092 = vlaneseq
        %v1093 = vshrl.u32 %v1092, 7
        %v1094 = vsub.s32 1, %v1093
        %v1095 = vrot.slane %v466, %v1094
        %v1096 = vlaneseq
        %v1097 = vshrl.u32 %v1096, 7
        %v1098 = vsub.s32 2, %v1097
        %v1099 = vrot.slane %v466, %v1098
        %v1100 = vlaneseq
        %v1101 = vshrl.u32 %v1100, 7
        %v1102 = vsub.s32 3, %v1101
        %v1103 = vrot.slane %v466, %v1102
        %v1108 = vadd.f32 %v1083, %v1091
        %v1109 = vadd.f32 %v1084, %v1095
        %v1110 = vadd.f32 %v1085, %v1099
        %v1111 = vadd.f32 %v1086, %v1103
        %v1112 = vxor.u32 %v1108, 2147483648
        %v1113 = vmul.f32 %v1112, 1.442695
        %v1114 = vpow.pop %v1113
        %v1115 = vadd.f32 %v1114, 1.0
        %v1116 = vrcp.pop %v1115
        %v1117 = vmul.f32 1.0, %v1116
        %v1118 = vxor.u32 %v1109, 2147483648
        %v1119 = vmul.f32 %v1118, 1.442695
        %v1120 = vpow.pop %v1119
        %v1121 = vadd.f32 %v1120, 1.0
        %v1122 = vrcp.pop %v1121
        %v1123 = vmul.f32 1.0, %v1122
        %v1124 = vtanh.pop %v1110
        %v1125 = vxor.u32 %v1111, 2147483648
        %v1126 = vmul.f32 %v1125, 1.442695
        %v1127 = vpow.pop %v1126
        %v1128 = vadd.f32 %v1127, 1.0
        %v1129 = vrcp.pop %v1128
        %v1130 = vmul.f32 1.0, %v1129
        %v1131 = vmul.f32 %v1123, 0.0
        %v1132 = vmul.f32 %v1117, %v1124
        %v1133 = vadd.f32 %v1131, %v1132
        %v1134 = vtanh.pop %v1133
        %v1135 = vmul.f32 %v1130, %v1134
        %v1136 = vpack.c.bf16 %v1135, %v1135
        %1137 = vst [vmem:[#allocation3] sm:$0xf] %v1136
        %s1138 = scalar_lea.vmem [#allocation2], 32
        %v1139 = vld [vmem:[%s1138] sm:$0xff]
        %v1140 = vld [vmem:[%s1138 + $0x8] sm:$0xff]
        %v1141 = vld [vmem:[%s1138 + $0x10] sm:$0xff]
        %v1142 = vld [vmem:[%s1138 + $0x18] sm:$0xff]
        %1143 = vmatprep.subr.bf16.mxu0 %v966
        %1144 = vmatpush1.bf16.msra.mxu0 %v965
        %1145 = vmatprep.subr.bf16.mxu0 %v962
        %1146 = vmatpush1.bf16.msra.mxu0 %v961
        %1147 = vmatprep.subr.bf16.mxu0 %v958
        %1148 = vmatpush1.bf16.msra.mxu0 %v957
        %1149 = vmatprep.subr.bf16.mxu0 %v954
        %1150 = vmatpush1.bf16.msra.mxu0 %v953
        %1151 = vmatprep.subr.bf16.mxu0 %v950
        %1152 = vmatpush1.bf16.msra.mxu0 %v949
        %1153 = vmatprep.subr.bf16.mxu0 %v946
        %1154 = vmatpush1.bf16.msra.mxu0 %v945
        %1155 = vmatprep.subr.bf16.mxu0 %v942
        %1156 = vmatpush1.bf16.msra.mxu0 %v941
        %1157 = vmatprep.subr.bf16.mxu0 %v938
        %1158 = vmatpush1.bf16.msra.mxu0 %v937
        %1159 = vmatprep.subr.bf16.mxu0 0
        %1160 = vmatpush2.bf16.msra.mxu0 0
        %1161 = vmatprep.subr.bf16.mxu0 0
        %1162 = vmatpush2.bf16.msra.mxu0 0
        %1163 = vmatprep.subr.bf16.mxu0 0
        %1164 = vmatpush2.bf16.msra.mxu0 0
        %1165 = vmatprep.subr.bf16.mxu0 0
        %1166 = vmatpush2.bf16.msra.mxu0 0
        %1167 = vmatprep.subr.bf16.mxu0 0
        %1168 = vmatpush2.bf16.msra.mxu0 0
        %1169 = vmatprep.subr.bf16.mxu0 0
        %1170 = vmatpush2.bf16.msra.mxu0 0
        %1171 = vmatprep.subr.bf16.mxu0 0
        %1172 = vmatpush2.bf16.msra.mxu0 0
        %1173 = vmatprep.subr.bf16.mxu0 0
        %1174 = vmatpush2.bf16.msra.mxu0 0
        %1175 = vmatprep.mubr.bf16.mxu0 0
        %1176 = vmatmul.mubr.bf16.gmra.mxu0 %v1136
        %v1177 = vpop.f32.mrf.mxu0
        %v1178 = vadd.f32 0.0, %v1177
        %v1179 = vpop.f32.mrf.mxu0
        %v1180 = vadd.f32 0.0, %v1179
        %v1181 = vpop.f32.mrf.mxu0
        %v1182 = vpop.f32.mrf.mxu0
        %1183 = vdwg.mxu0
        %1184 = vmatprep.subr.bf16.mxu0 %v968
        %1185 = vmatpush1.bf16.msra.mxu0 %v967
        %1186 = vmatprep.subr.bf16.mxu0 %v964
        %1187 = vmatpush1.bf16.msra.mxu0 %v963
        %1188 = vmatprep.subr.bf16.mxu0 %v960
        %1189 = vmatpush1.bf16.msra.mxu0 %v959
        %1190 = vmatprep.subr.bf16.mxu0 %v956
        %1191 = vmatpush1.bf16.msra.mxu0 %v955
        %1192 = vmatprep.subr.bf16.mxu0 %v952
        %1193 = vmatpush1.bf16.msra.mxu0 %v951
        %1194 = vmatprep.subr.bf16.mxu0 %v948
        %1195 = vmatpush1.bf16.msra.mxu0 %v947
        %1196 = vmatprep.subr.bf16.mxu0 %v944
        %1197 = vmatpush1.bf16.msra.mxu0 %v943
        %1198 = vmatprep.subr.bf16.mxu0 %v940
        %1199 = vmatpush1.bf16.msra.mxu0 %v939
        %1200 = vmatprep.subr.bf16.mxu0 0
        %1201 = vmatpush2.bf16.msra.mxu0 0
        %1202 = vmatprep.subr.bf16.mxu0 0
        %1203 = vmatpush2.bf16.msra.mxu0 0
        %1204 = vmatprep.subr.bf16.mxu0 0
        %1205 = vmatpush2.bf16.msra.mxu0 0
        %1206 = vmatprep.subr.bf16.mxu0 0
        %1207 = vmatpush2.bf16.msra.mxu0 0
        %1208 = vmatprep.subr.bf16.mxu0 0
        %1209 = vmatpush2.bf16.msra.mxu0 0
        %1210 = vmatprep.subr.bf16.mxu0 0
        %1211 = vmatpush2.bf16.msra.mxu0 0
        %1212 = vmatprep.subr.bf16.mxu0 0
        %1213 = vmatpush2.bf16.msra.mxu0 0
        %1214 = vmatprep.subr.bf16.mxu0 0
        %1215 = vmatpush2.bf16.msra.mxu0 0
        %1216 = vmatprep.mubr.bf16.mxu0 0
        %1217 = vmatmul.mubr.bf16.gmra.mxu0 %v1136
        %v1218 = vpop.f32.mrf.mxu0
        %v1219 = vadd.f32 0.0, %v1218
        %v1220 = vpop.f32.mrf.mxu0
        %v1221 = vadd.f32 0.0, %v1220
        %v1222 = vpop.f32.mrf.mxu0
        %v1223 = vpop.f32.mrf.mxu0
        %1224 = vdwg.mxu0
        %v1225 = vadd.f32 %v1139, %v1178
        %v1226 = vadd.f32 %v1140, %v1180
        %v1227 = vadd.f32 %v1141, %v1219
        %v1228 = vadd.f32 %v1142, %v1221
        %v1229 = vadd.f32 %v1225, %v1091
        %v1230 = vadd.f32 %v1226, %v1095
        %v1231 = vadd.f32 %v1227, %v1099
        %v1232 = vadd.f32 %v1228, %v1103
        %v1233 = vxor.u32 %v1229, 2147483648
        %v1234 = vmul.f32 %v1233, 1.442695
        %v1235 = vpow.pop %v1234
        %v1236 = vadd.f32 %v1235, 1.0
        %v1237 = vrcp.pop %v1236
        %v1238 = vmul.f32 1.0, %v1237
        %v1239 = vxor.u32 %v1230, 2147483648
        %v1240 = vmul.f32 %v1239, 1.442695
        %v1241 = vpow.pop %v1240
        %v1242 = vadd.f32 %v1241, 1.0
        %v1243 = vrcp.pop %v1242
        %v1244 = vmul.f32 1.0, %v1243
        %v1245 = vtanh.pop %v1231
        %v1246 = vxor.u32 %v1232, 2147483648
        %v1247 = vmul.f32 %v1246, 1.442695
        %v1248 = vpow.pop %v1247
        %v1249 = vadd.f32 %v1248, 1.0
        %v1250 = vrcp.pop %v1249
        %v1251 = vmul.f32 1.0, %v1250
        %v1252 = vmul.f32 %v1244, %v1133
        %v1253 = vmul.f32 %v1238, %v1245
        %v1254 = vadd.f32 %v1252, %v1253
        %v1255 = vtanh.pop %v1254
        %v1256 = vmul.f32 %v1251, %v1255
        %v1257 = vpack.c.bf16 %v1256, %v1256
        %s1258 = scalar_lea.vmem [#allocation3], 4
        %1259 = vst [vmem:[%s1258] sm:$0xf] %v1257
        %s1260 = scalar_lea.vmem [#allocation2], 64
        %v1261 = vld [vmem:[%s1260] sm:$0xff]
        %v1262 = vld [vmem:[%s1260 + $0x8] sm:$0xff]
        %v1263 = vld [vmem:[%s1260 + $0x10] sm:$0xff]
        %v1264 = vld [vmem:[%s1260 + $0x18] sm:$0xff]
        %1265 = vmatprep.subr.bf16.mxu0 %v966
        %1266 = vmatpush1.bf16.msra.mxu0 %v965
        %1267 = vmatprep.subr.bf16.mxu0 %v962
        %1268 = vmatpush1.bf16.msra.mxu0 %v961
        %1269 = vmatprep.subr.bf16.mxu0 %v958
        %1270 = vmatpush1.bf16.msra.mxu0 %v957
        %1271 = vmatprep.subr.bf16.mxu0 %v954
        %1272 = vmatpush1.bf16.msra.mxu0 %v953
        %1273 = vmatprep.subr.bf16.mxu0 %v950
        %1274 = vmatpush1.bf16.msra.mxu0 %v949
        %1275 = vmatprep.subr.bf16.mxu0 %v946
        %1276 = vmatpush1.bf16.msra.mxu0 %v945
        %1277 = vmatprep.subr.bf16.mxu0 %v942
        %1278 = vmatpush1.bf16.msra.mxu0 %v941
        %1279 = vmatprep.subr.bf16.mxu0 %v938
        %1280 = vmatpush1.bf16.msra.mxu0 %v937
        %1281 = vmatprep.subr.bf16.mxu0 0
        %1282 = vmatpush2.bf16.msra.mxu0 0
        %1283 = vmatprep.subr.bf16.mxu0 0
        %1284 = vmatpush2.bf16.msra.mxu0 0
        %1285 = vmatprep.subr.bf16.mxu0 0
        %1286 = vmatpush2.bf16.msra.mxu0 0
        %1287 = vmatprep.subr.bf16.mxu0 0
        %1288 = vmatpush2.bf16.msra.mxu0 0
        %1289 = vmatprep.subr.bf16.mxu0 0
        %1290 = vmatpush2.bf16.msra.mxu0 0
        %1291 = vmatprep.subr.bf16.mxu0 0
        %1292 = vmatpush2.bf16.msra.mxu0 0
        %1293 = vmatprep.subr.bf16.mxu0 0
        %1294 = vmatpush2.bf16.msra.mxu0 0
        %1295 = vmatprep.subr.bf16.mxu0 0
        %1296 = vmatpush2.bf16.msra.mxu0 0
        %1297 = vmatprep.mubr.bf16.mxu0 0
        %1298 = vmatmul.mubr.bf16.gmra.mxu0 %v1257
        %v1299 = vpop.f32.mrf.mxu0
        %v1300 = vadd.f32 0.0, %v1299
        %v1301 = vpop.f32.mrf.mxu0
        %v1302 = vadd.f32 0.0, %v1301
        %v1303 = vpop.f32.mrf.mxu0
        %v1304 = vpop.f32.mrf.mxu0
        %1305 = vdwg.mxu0
        %1306 = vmatprep.subr.bf16.mxu0 %v968
        %1307 = vmatpush1.bf16.msra.mxu0 %v967
        %1308 = vmatprep.subr.bf16.mxu0 %v964
        %1309 = vmatpush1.bf16.msra.mxu0 %v963
        %1310 = vmatprep.subr.bf16.mxu0 %v960
        %1311 = vmatpush1.bf16.msra.mxu0 %v959
        %1312 = vmatprep.subr.bf16.mxu0 %v956
        %1313 = vmatpush1.bf16.msra.mxu0 %v955
        %1314 = vmatprep.subr.bf16.mxu0 %v952
        %1315 = vmatpush1.bf16.msra.mxu0 %v951
        %1316 = vmatprep.subr.bf16.mxu0 %v948
        %1317 = vmatpush1.bf16.msra.mxu0 %v947
        %1318 = vmatprep.subr.bf16.mxu0 %v944
        %1319 = vmatpush1.bf16.msra.mxu0 %v943
        %1320 = vmatprep.subr.bf16.mxu0 %v940
        %1321 = vmatpush1.bf16.msra.mxu0 %v939
        %1322 = vmatprep.subr.bf16.mxu0 0
        %1323 = vmatpush2.bf16.msra.mxu0 0
        %1324 = vmatprep.subr.bf16.mxu0 0
        %1325 = vmatpush2.bf16.msra.mxu0 0
        %1326 = vmatprep.subr.bf16.mxu0 0
        %1327 = vmatpush2.bf16.msra.mxu0 0
        %1328 = vmatprep.subr.bf16.mxu0 0
        %1329 = vmatpush2.bf16.msra.mxu0 0
        %1330 = vmatprep.subr.bf16.mxu0 0
        %1331 = vmatpush2.bf16.msra.mxu0 0
        %1332 = vmatprep.subr.bf16.mxu0 0
        %1333 = vmatpush2.bf16.msra.mxu0 0
        %1334 = vmatprep.subr.bf16.mxu0 0
        %1335 = vmatpush2.bf16.msra.mxu0 0
        %1336 = vmatprep.subr.bf16.mxu0 0
        %1337 = vmatpush2.bf16.msra.mxu0 0
        %1338 = vmatprep.mubr.bf16.mxu0 0
        %1339 = vmatmul.mubr.bf16.gmra.mxu0 %v1257
        %v1340 = vpop.f32.mrf.mxu0
        %v1341 = vadd.f32 0.0, %v1340
        %v1342 = vpop.f32.mrf.mxu0
        %v1343 = vadd.f32 0.0, %v1342
        %v1344 = vpop.f32.mrf.mxu0
        %v1345 = vpop.f32.mrf.mxu0
        %1346 = vdwg.mxu0
        %v1347 = vadd.f32 %v1261, %v1300
        %v1348 = vadd.f32 %v1262, %v1302
        %v1349 = vadd.f32 %v1263, %v1341
        %v1350 = vadd.f32 %v1264, %v1343
        %v1351 = vadd.f32 %v1347, %v1091
        %v1352 = vadd.f32 %v1348, %v1095
        %v1353 = vadd.f32 %v1349, %v1099
        %v1354 = vadd.f32 %v1350, %v1103
        %v1355 = vxor.u32 %v1351, 2147483648
        %v1356 = vmul.f32 %v1355, 1.442695
        %v1357 = vpow.pop %v1356
        %v1358 = vadd.f32 %v1357, 1.0
        %v1359 = vrcp.pop %v1358
        %v1360 = vmul.f32 1.0, %v1359
        %v1361 = vxor.u32 %v1352, 2147483648
        %v1362 = vmul.f32 %v1361, 1.442695
        %v1363 = vpow.pop %v1362
        %v1364 = vadd.f32 %v1363, 1.0
        %v1365 = vrcp.pop %v1364
        %v1366 = vmul.f32 1.0, %v1365
        %v1367 = vtanh.pop %v1353
        %v1368 = vxor.u32 %v1354, 2147483648
        %v1369 = vmul.f32 %v1368, 1.442695
        %v1370 = vpow.pop %v1369
        %v1371 = vadd.f32 %v1370, 1.0
        %v1372 = vrcp.pop %v1371
        %v1373 = vmul.f32 1.0, %v1372
        %v1374 = vmul.f32 %v1366, %v1254
        %v1375 = vmul.f32 %v1360, %v1367
        %v1376 = vadd.f32 %v1374, %v1375
        %v1377 = vtanh.pop %v1376
        %v1378 = vmul.f32 %v1373, %v1377
        %v1379 = vpack.c.bf16 %v1378, %v1378
        %s1380 = scalar_lea.vmem [#allocation3], 8
        %1381 = vst [vmem:[%s1380] sm:$0xf] %v1379
        %s1382 = scalar_lea.vmem [#allocation2], 96
        %v1383 = vld [vmem:[%s1382] sm:$0xff]
        %v1384 = vld [vmem:[%s1382 + $0x8] sm:$0xff]
        %v1385 = vld [vmem:[%s1382 + $0x10] sm:$0xff]
        %v1386 = vld [vmem:[%s1382 + $0x18] sm:$0xff]
        %1387 = vmatprep.subr.bf16.mxu0 %v966
        %1388 = vmatpush1.bf16.msra.mxu0 %v965
        %1389 = vmatprep.subr.bf16.mxu0 %v962
        %1390 = vmatpush1.bf16.msra.mxu0 %v961
        %1391 = vmatprep.subr.bf16.mxu0 %v958
        %1392 = vmatpush1.bf16.msra.mxu0 %v957
        %1393 = vmatprep.subr.bf16.mxu0 %v954
        %1394 = vmatpush1.bf16.msra.mxu0 %v953
        %1395 = vmatprep.subr.bf16.mxu0 %v950
        %1396 = vmatpush1.bf16.msra.mxu0 %v949
        %1397 = vmatprep.subr.bf16.mxu0 %v946
        %1398 = vmatpush1.bf16.msra.mxu0 %v945
        %1399 = vmatprep.subr.bf16.mxu0 %v942
        %1400 = vmatpush1.bf16.msra.mxu0 %v941
        %1401 = vmatprep.subr.bf16.mxu0 %v938
        %1402 = vmatpush1.bf16.msra.mxu0 %v937
        %1403 = vmatprep.subr.bf16.mxu0 0
        %1404 = vmatpush2.bf16.msra.mxu0 0
        %1405 = vmatprep.subr.bf16.mxu0 0
        %1406 = vmatpush2.bf16.msra.mxu0 0
        %1407 = vmatprep.subr.bf16.mxu0 0
        %1408 = vmatpush2.bf16.msra.mxu0 0
        %1409 = vmatprep.subr.bf16.mxu0 0
        %1410 = vmatpush2.bf16.msra.mxu0 0
        %1411 = vmatprep.subr.bf16.mxu0 0
        %1412 = vmatpush2.bf16.msra.mxu0 0
        %1413 = vmatprep.subr.bf16.mxu0 0
        %1414 = vmatpush2.bf16.msra.mxu0 0
        %1415 = vmatprep.subr.bf16.mxu0 0
        %1416 = vmatpush2.bf16.msra.mxu0 0
        %1417 = vmatprep.subr.bf16.mxu0 0
        %1418 = vmatpush2.bf16.msra.mxu0 0
        %1419 = vmatprep.mubr.bf16.mxu0 0
        %1420 = vmatmul.mubr.bf16.gmra.mxu0 %v1379
        %v1421 = vpop.f32.mrf.mxu0
        %v1422 = vadd.f32 0.0, %v1421
        %v1423 = vpop.f32.mrf.mxu0
        %v1424 = vadd.f32 0.0, %v1423
        %v1425 = vpop.f32.mrf.mxu0
        %v1426 = vpop.f32.mrf.mxu0
        %1427 = vdwg.mxu0
        %1428 = vmatprep.subr.bf16.mxu0 %v968
        %1429 = vmatpush1.bf16.msra.mxu0 %v967
        %1430 = vmatprep.subr.bf16.mxu0 %v964
        %1431 = vmatpush1.bf16.msra.mxu0 %v963
        %1432 = vmatprep.subr.bf16.mxu0 %v960
        %1433 = vmatpush1.bf16.msra.mxu0 %v959
        %1434 = vmatprep.subr.bf16.mxu0 %v956
        %1435 = vmatpush1.bf16.msra.mxu0 %v955
        %1436 = vmatprep.subr.bf16.mxu0 %v952
        %1437 = vmatpush1.bf16.msra.mxu0 %v951
        %1438 = vmatprep.subr.bf16.mxu0 %v948
        %1439 = vmatpush1.bf16.msra.mxu0 %v947
        %1440 = vmatprep.subr.bf16.mxu0 %v944
        %1441 = vmatpush1.bf16.msra.mxu0 %v943
        %1442 = vmatprep.subr.bf16.mxu0 %v940
        %1443 = vmatpush1.bf16.msra.mxu0 %v939
        %1444 = vmatprep.subr.bf16.mxu0 0
        %1445 = vmatpush2.bf16.msra.mxu0 0
        %1446 = vmatprep.subr.bf16.mxu0 0
        %1447 = vmatpush2.bf16.msra.mxu0 0
        %1448 = vmatprep.subr.bf16.mxu0 0
        %1449 = vmatpush2.bf16.msra.mxu0 0
        %1450 = vmatprep.subr.bf16.mxu0 0
        %1451 = vmatpush2.bf16.msra.mxu0 0
        %1452 = vmatprep.subr.bf16.mxu0 0
        %1453 = vmatpush2.bf16.msra.mxu0 0
        %1454 = vmatprep.subr.bf16.mxu0 0
        %1455 = vmatpush2.bf16.msra.mxu0 0
        %1456 = vmatprep.subr.bf16.mxu0 0
        %1457 = vmatpush2.bf16.msra.mxu0 0
        %1458 = vmatprep.subr.bf16.mxu0 0
        %1459 = vmatpush2.bf16.msra.mxu0 0
        %1460 = vmatprep.mubr.bf16.mxu0 0
        %1461 = vmatmul.mubr.bf16.gmra.mxu0 %v1379
        %v1462 = vpop.f32.mrf.mxu0
        %v1463 = vadd.f32 0.0, %v1462
        %v1464 = vpop.f32.mrf.mxu0
        %v1465 = vadd.f32 0.0, %v1464
        %v1466 = vpop.f32.mrf.mxu0
        %v1467 = vpop.f32.mrf.mxu0
        %1468 = vdwg.mxu0
        %v1469 = vadd.f32 %v1383, %v1422
        %v1470 = vadd.f32 %v1384, %v1424
        %v1471 = vadd.f32 %v1385, %v1463
        %v1472 = vadd.f32 %v1386, %v1465
        %v1473 = vadd.f32 %v1469, %v1091
        %v1474 = vadd.f32 %v1470, %v1095
        %v1475 = vadd.f32 %v1471, %v1099
        %v1476 = vadd.f32 %v1472, %v1103
        %v1477 = vxor.u32 %v1473, 2147483648
        %v1478 = vmul.f32 %v1477, 1.442695
        %v1479 = vpow.pop %v1478
        %v1480 = vadd.f32 %v1479, 1.0
        %v1481 = vrcp.pop %v1480
        %v1482 = vmul.f32 1.0, %v1481
        %v1483 = vxor.u32 %v1474, 2147483648
        %v1484 = vmul.f32 %v1483, 1.442695
        %v1485 = vpow.pop %v1484
        %v1486 = vadd.f32 %v1485, 1.0
        %v1487 = vrcp.pop %v1486
        %v1488 = vmul.f32 1.0, %v1487
        %v1489 = vtanh.pop %v1475
        %v1490 = vxor.u32 %v1476, 2147483648
        %v1491 = vmul.f32 %v1490, 1.442695
        %v1492 = vpow.pop %v1491
        %v1493 = vadd.f32 %v1492, 1.0
        %v1494 = vrcp.pop %v1493
        %v1495 = vmul.f32 1.0, %v1494
        %v1496 = vmul.f32 %v1488, %v1376
        %v1497 = vmul.f32 %v1482, %v1489
        %v1498 = vadd.f32 %v1496, %v1497
        %v1499 = vtanh.pop %v1498
        %v1500 = vmul.f32 %v1495, %v1499
        %v1501 = vpack.c.bf16 %v1500, %v1500
        %s1502 = scalar_lea.vmem [#allocation3], 12
        %1503 = vst [vmem:[%s1502] sm:$0xf] %v1501
        %s1504 = scalar_lea.vmem [#allocation2], 128
        %v1505 = vld [vmem:[%s1504] sm:$0xff]
        %v1506 = vld [vmem:[%s1504 + $0x8] sm:$0xff]
        %v1507 = vld [vmem:[%s1504 + $0x10] sm:$0xff]
        %v1508 = vld [vmem:[%s1504 + $0x18] sm:$0xff]
        %1509 = vmatprep.subr.bf16.mxu0 %v966
        %1510 = vmatpush1.bf16.msra.mxu0 %v965
        %1511 = vmatprep.subr.bf16.mxu0 %v962
        %1512 = vmatpush1.bf16.msra.mxu0 %v961
        %1513 = vmatprep.subr.bf16.mxu0 %v958
        %1514 = vmatpush1.bf16.msra.mxu0 %v957
        %1515 = vmatprep.subr.bf16.mxu0 %v954
        %1516 = vmatpush1.bf16.msra.mxu0 %v953
        %1517 = vmatprep.subr.bf16.mxu0 %v950
        %1518 = vmatpush1.bf16.msra.mxu0 %v949
        %1519 = vmatprep.subr.bf16.mxu0 %v946
        %1520 = vmatpush1.bf16.msra.mxu0 %v945
        %1521 = vmatprep.subr.bf16.mxu0 %v942
        %1522 = vmatpush1.bf16.msra.mxu0 %v941
        %1523 = vmatprep.subr.bf16.mxu0 %v938
        %1524 = vmatpush1.bf16.msra.mxu0 %v937
        %1525 = vmatprep.subr.bf16.mxu0 0
        %1526 = vmatpush2.bf16.msra.mxu0 0
        %1527 = vmatprep.subr.bf16.mxu0 0
        %1528 = vmatpush2.bf16.msra.mxu0 0
        %1529 = vmatprep.subr.bf16.mxu0 0
        %1530 = vmatpush2.bf16.msra.mxu0 0
        %1531 = vmatprep.subr.bf16.mxu0 0
        %1532 = vmatpush2.bf16.msra.mxu0 0
        %1533 = vmatprep.subr.bf16.mxu0 0
        %1534 = vmatpush2.bf16.msra.mxu0 0
        %1535 = vmatprep.subr.bf16.mxu0 0
        %1536 = vmatpush2.bf16.msra.mxu0 0
        %1537 = vmatprep.subr.bf16.mxu0 0
        %1538 = vmatpush2.bf16.msra.mxu0 0
        %1539 = vmatprep.subr.bf16.mxu0 0
        %1540 = vmatpush2.bf16.msra.mxu0 0
        %1541 = vmatprep.mubr.bf16.mxu0 0
        %1542 = vmatmul.mubr.bf16.gmra.mxu0 %v1501
        %v1543 = vpop.f32.mrf.mxu0
        %v1544 = vadd.f32 0.0, %v1543
        %v1545 = vpop.f32.mrf.mxu0
        %v1546 = vadd.f32 0.0, %v1545
        %v1547 = vpop.f32.mrf.mxu0
        %v1548 = vpop.f32.mrf.mxu0
        %1549 = vdwg.mxu0
        %1550 = vmatprep.subr.bf16.mxu0 %v968
        %1551 = vmatpush1.bf16.msra.mxu0 %v967
        %1552 = vmatprep.subr.bf16.mxu0 %v964
        %1553 = vmatpush1.bf16.msra.mxu0 %v963
        %1554 = vmatprep.subr.bf16.mxu0 %v960
        %1555 = vmatpush1.bf16.msra.mxu0 %v959
        %1556 = vmatprep.subr.bf16.mxu0 %v956
        %1557 = vmatpush1.bf16.msra.mxu0 %v955
        %1558 = vmatprep.subr.bf16.mxu0 %v952
        %1559 = vmatpush1.bf16.msra.mxu0 %v951
        %1560 = vmatprep.subr.bf16.mxu0 %v948
        %1561 = vmatpush1.bf16.msra.mxu0 %v947
        %1562 = vmatprep.subr.bf16.mxu0 %v944
        %1563 = vmatpush1.bf16.msra.mxu0 %v943
        %1564 = vmatprep.subr.bf16.mxu0 %v940
        %1565 = vmatpush1.bf16.msra.mxu0 %v939
        %1566 = vmatprep.subr.bf16.mxu0 0
        %1567 = vmatpush2.bf16.msra.mxu0 0
        %1568 = vmatprep.subr.bf16.mxu0 0
        %1569 = vmatpush2.bf16.msra.mxu0 0
        %1570 = vmatprep.subr.bf16.mxu0 0
        %1571 = vmatpush2.bf16.msra.mxu0 0
        %1572 = vmatprep.subr.bf16.mxu0 0
        %1573 = vmatpush2.bf16.msra.mxu0 0
        %1574 = vmatprep.subr.bf16.mxu0 0
        %1575 = vmatpush2.bf16.msra.mxu0 0
        %1576 = vmatprep.subr.bf16.mxu0 0
        %1577 = vmatpush2.bf16.msra.mxu0 0
        %1578 = vmatprep.subr.bf16.mxu0 0
        %1579 = vmatpush2.bf16.msra.mxu0 0
        %1580 = vmatprep.subr.bf16.mxu0 0
        %1581 = vmatpush2.bf16.msra.mxu0 0
        %1582 = vmatprep.mubr.bf16.mxu0 0
        %1583 = vmatmul.mubr.bf16.gmra.mxu0 %v1501
        %v1584 = vpop.f32.mrf.mxu0
        %v1585 = vadd.f32 0.0, %v1584
        %v1586 = vpop.f32.mrf.mxu0
        %v1587 = vadd.f32 0.0, %v1586
        %v1588 = vpop.f32.mrf.mxu0
        %v1589 = vpop.f32.mrf.mxu0
        %1590 = vdwg.mxu0
        %v1591 = vadd.f32 %v1505, %v1544
        %v1592 = vadd.f32 %v1506, %v1546
        %v1593 = vadd.f32 %v1507, %v1585
        %v1594 = vadd.f32 %v1508, %v1587
        %v1595 = vadd.f32 %v1591, %v1091
        %v1596 = vadd.f32 %v1592, %v1095
        %v1597 = vadd.f32 %v1593, %v1099
        %v1598 = vadd.f32 %v1594, %v1103
        %v1599 = vxor.u32 %v1595, 2147483648
        %v1600 = vmul.f32 %v1599, 1.442695
        %v1601 = vpow.pop %v1600
        %v1602 = vadd.f32 %v1601, 1.0
        %v1603 = vrcp.pop %v1602
        %v1604 = vmul.f32 1.0, %v1603
        %v1605 = vxor.u32 %v1596, 2147483648
        %v1606 = vmul.f32 %v1605, 1.442695
        %v1607 = vpow.pop %v1606
        %v1608 = vadd.f32 %v1607, 1.0
        %v1609 = vrcp.pop %v1608
        %v1610 = vmul.f32 1.0, %v1609
        %v1611 = vtanh.pop %v1597
        %v1612 = vxor.u32 %v1598, 2147483648
        %v1613 = vmul.f32 %v1612, 1.442695
        %v1614 = vpow.pop %v1613
        %v1615 = vadd.f32 %v1614, 1.0
        %v1616 = vrcp.pop %v1615
        %v1617 = vmul.f32 1.0, %v1616
        %v1618 = vmul.f32 %v1610, %v1498
        %v1619 = vmul.f32 %v1604, %v1611
        %v1620 = vadd.f32 %v1618, %v1619
        %v1621 = vtanh.pop %v1620
        %v1622 = vmul.f32 %v1617, %v1621
        %v1623 = vpack.c.bf16 %v1622, %v1622
        %s1624 = scalar_lea.vmem [#allocation3], 16
        %1625 = vst [vmem:[%s1624] sm:$0xf] %v1623
        %s1626 = scalar_lea.vmem [#allocation2], 160
        %v1627 = vld [vmem:[%s1626] sm:$0xff]
        %v1628 = vld [vmem:[%s1626 + $0x8] sm:$0xff]
        %v1629 = vld [vmem:[%s1626 + $0x10] sm:$0xff]
        %v1630 = vld [vmem:[%s1626 + $0x18] sm:$0xff]
        %1631 = vmatprep.subr.bf16.mxu0 %v966
        %1632 = vmatpush1.bf16.msra.mxu0 %v965
        %1633 = vmatprep.subr.bf16.mxu0 %v962
        %1634 = vmatpush1.bf16.msra.mxu0 %v961
        %1635 = vmatprep.subr.bf16.mxu0 %v958
        %1636 = vmatpush1.bf16.msra.mxu0 %v957
        %1637 = vmatprep.subr.bf16.mxu0 %v954
        %1638 = vmatpush1.bf16.msra.mxu0 %v953
        %1639 = vmatprep.subr.bf16.mxu0 %v950
        %1640 = vmatpush1.bf16.msra.mxu0 %v949
        %1641 = vmatprep.subr.bf16.mxu0 %v946
        %1642 = vmatpush1.bf16.msra.mxu0 %v945
        %1643 = vmatprep.subr.bf16.mxu0 %v942
        %1644 = vmatpush1.bf16.msra.mxu0 %v941
        %1645 = vmatprep.subr.bf16.mxu0 %v938
        %1646 = vmatpush1.bf16.msra.mxu0 %v937
        %1647 = vmatprep.subr.bf16.mxu0 0
        %1648 = vmatpush2.bf16.msra.mxu0 0
        %1649 = vmatprep.subr.bf16.mxu0 0
        %1650 = vmatpush2.bf16.msra.mxu0 0
        %1651 = vmatprep.subr.bf16.mxu0 0
        %1652 = vmatpush2.bf16.msra.mxu0 0
        %1653 = vmatprep.subr.bf16.mxu0 0
        %1654 = vmatpush2.bf16.msra.mxu0 0
        %1655 = vmatprep.subr.bf16.mxu0 0
        %1656 = vmatpush2.bf16.msra.mxu0 0
        %1657 = vmatprep.subr.bf16.mxu0 0
        %1658 = vmatpush2.bf16.msra.mxu0 0
        %1659 = vmatprep.subr.bf16.mxu0 0
        %1660 = vmatpush2.bf16.msra.mxu0 0
        %1661 = vmatprep.subr.bf16.mxu0 0
        %1662 = vmatpush2.bf16.msra.mxu0 0
        %1663 = vmatprep.mubr.bf16.mxu0 0
        %1664 = vmatmul.mubr.bf16.gmra.mxu0 %v1623
        %v1665 = vpop.f32.mrf.mxu0
        %v1666 = vadd.f32 0.0, %v1665
        %v1667 = vpop.f32.mrf.mxu0
        %v1668 = vadd.f32 0.0, %v1667
        %v1669 = vpop.f32.mrf.mxu0
        %v1670 = vpop.f32.mrf.mxu0
        %1671 = vdwg.mxu0
        %1672 = vmatprep.subr.bf16.mxu0 %v968
        %1673 = vmatpush1.bf16.msra.mxu0 %v967
        %1674 = vmatprep.subr.bf16.mxu0 %v964
        %1675 = vmatpush1.bf16.msra.mxu0 %v963
        %1676 = vmatprep.subr.bf16.mxu0 %v960
        %1677 = vmatpush1.bf16.msra.mxu0 %v959
        %1678 = vmatprep.subr.bf16.mxu0 %v956
        %1679 = vmatpush1.bf16.msra.mxu0 %v955
        %1680 = vmatprep.subr.bf16.mxu0 %v952
        %1681 = vmatpush1.bf16.msra.mxu0 %v951
        %1682 = vmatprep.subr.bf16.mxu0 %v948
        %1683 = vmatpush1.bf16.msra.mxu0 %v947
        %1684 = vmatprep.subr.bf16.mxu0 %v944
        %1685 = vmatpush1.bf16.msra.mxu0 %v943
        %1686 = vmatprep.subr.bf16.mxu0 %v940
        %1687 = vmatpush1.bf16.msra.mxu0 %v939
        %1688 = vmatprep.subr.bf16.mxu0 0
        %1689 = vmatpush2.bf16.msra.mxu0 0
        %1690 = vmatprep.subr.bf16.mxu0 0
        %1691 = vmatpush2.bf16.msra.mxu0 0
        %1692 = vmatprep.subr.bf16.mxu0 0
        %1693 = vmatpush2.bf16.msra.mxu0 0
        %1694 = vmatprep.subr.bf16.mxu0 0
        %1695 = vmatpush2.bf16.msra.mxu0 0
        %1696 = vmatprep.subr.bf16.mxu0 0
        %1697 = vmatpush2.bf16.msra.mxu0 0
        %1698 = vmatprep.subr.bf16.mxu0 0
        %1699 = vmatpush2.bf16.msra.mxu0 0
        %1700 = vmatprep.subr.bf16.mxu0 0
        %1701 = vmatpush2.bf16.msra.mxu0 0
        %1702 = vmatprep.subr.bf16.mxu0 0
        %1703 = vmatpush2.bf16.msra.mxu0 0
        %1704 = vmatprep.mubr.bf16.mxu0 0
        %1705 = vmatmul.mubr.bf16.gmra.mxu0 %v1623
        %v1706 = vpop.f32.mrf.mxu0
        %v1707 = vadd.f32 0.0, %v1706
        %v1708 = vpop.f32.mrf.mxu0
        %v1709 = vadd.f32 0.0, %v1708
        %v1710 = vpop.f32.mrf.mxu0
        %v1711 = vpop.f32.mrf.mxu0
        %1712 = vdwg.mxu0
        %v1713 = vadd.f32 %v1627, %v1666
        %v1714 = vadd.f32 %v1628, %v1668
        %v1715 = vadd.f32 %v1629, %v1707
        %v1716 = vadd.f32 %v1630, %v1709
        %v1717 = vadd.f32 %v1713, %v1091
        %v1718 = vadd.f32 %v1714, %v1095
        %v1719 = vadd.f32 %v1715, %v1099
        %v1720 = vadd.f32 %v1716, %v1103
        %v1721 = vxor.u32 %v1717, 2147483648
        %v1722 = vmul.f32 %v1721, 1.442695
        %v1723 = vpow.pop %v1722
        %v1724 = vadd.f32 %v1723, 1.0
        %v1725 = vrcp.pop %v1724
        %v1726 = vmul.f32 1.0, %v1725
        %v1727 = vxor.u32 %v1718, 2147483648
        %v1728 = vmul.f32 %v1727, 1.442695
        %v1729 = vpow.pop %v1728
        %v1730 = vadd.f32 %v1729, 1.0
        %v1731 = vrcp.pop %v1730
        %v1732 = vmul.f32 1.0, %v1731
        %v1733 = vtanh.pop %v1719
        %v1734 = vxor.u32 %v1720, 2147483648
        %v1735 = vmul.f32 %v1734, 1.442695
        %v1736 = vpow.pop %v1735
        %v1737 = vadd.f32 %v1736, 1.0
        %v1738 = vrcp.pop %v1737
        %v1739 = vmul.f32 1.0, %v1738
        %v1740 = vmul.f32 %v1732, %v1620
        %v1741 = vmul.f32 %v1726, %v1733
        %v1742 = vadd.f32 %v1740, %v1741
        %v1743 = vtanh.pop %v1742
        %v1744 = vmul.f32 %v1739, %v1743
        %v1745 = vpack.c.bf16 %v1744, %v1744
        %s1746 = scalar_lea.vmem [#allocation3], 20
        %1747 = vst [vmem:[%s1746] sm:$0xf] %v1745
        %s1748 = scalar_lea.vmem [#allocation2], 192
        %v1749 = vld [vmem:[%s1748] sm:$0xff]
        %v1750 = vld [vmem:[%s1748 + $0x8] sm:$0xff]
        %v1751 = vld [vmem:[%s1748 + $0x10] sm:$0xff]
        %v1752 = vld [vmem:[%s1748 + $0x18] sm:$0xff]
        %1753 = vmatprep.subr.bf16.mxu0 %v966
        %1754 = vmatpush1.bf16.msra.mxu0 %v965
        %1755 = vmatprep.subr.bf16.mxu0 %v962
        %1756 = vmatpush1.bf16.msra.mxu0 %v961
        %1757 = vmatprep.subr.bf16.mxu0 %v958
        %1758 = vmatpush1.bf16.msra.mxu0 %v957
        %1759 = vmatprep.subr.bf16.mxu0 %v954
        %1760 = vmatpush1.bf16.msra.mxu0 %v953
        %1761 = vmatprep.subr.bf16.mxu0 %v950
        %1762 = vmatpush1.bf16.msra.mxu0 %v949
        %1763 = vmatprep.subr.bf16.mxu0 %v946
        %1764 = vmatpush1.bf16.msra.mxu0 %v945
        %1765 = vmatprep.subr.bf16.mxu0 %v942
        %1766 = vmatpush1.bf16.msra.mxu0 %v941
        %1767 = vmatprep.subr.bf16.mxu0 %v938
        %1768 = vmatpush1.bf16.msra.mxu0 %v937
        %1769 = vmatprep.subr.bf16.mxu0 0
        %1770 = vmatpush2.bf16.msra.mxu0 0
        %1771 = vmatprep.subr.bf16.mxu0 0
        %1772 = vmatpush2.bf16.msra.mxu0 0
        %1773 = vmatprep.subr.bf16.mxu0 0
        %1774 = vmatpush2.bf16.msra.mxu0 0
        %1775 = vmatprep.subr.bf16.mxu0 0
        %1776 = vmatpush2.bf16.msra.mxu0 0
        %1777 = vmatprep.subr.bf16.mxu0 0
        %1778 = vmatpush2.bf16.msra.mxu0 0
        %1779 = vmatprep.subr.bf16.mxu0 0
        %1780 = vmatpush2.bf16.msra.mxu0 0
        %1781 = vmatprep.subr.bf16.mxu0 0
        %1782 = vmatpush2.bf16.msra.mxu0 0
        %1783 = vmatprep.subr.bf16.mxu0 0
        %1784 = vmatpush2.bf16.msra.mxu0 0
        %1785 = vmatprep.mubr.bf16.mxu0 0
        %1786 = vmatmul.mubr.bf16.gmra.mxu0 %v1745
        %v1787 = vpop.f32.mrf.mxu0
        %v1788 = vadd.f32 0.0, %v1787
        %v1789 = vpop.f32.mrf.mxu0
        %v1790 = vadd.f32 0.0, %v1789
        %v1791 = vpop.f32.mrf.mxu0
        %v1792 = vpop.f32.mrf.mxu0
        %1793 = vdwg.mxu0
        %1794 = vmatprep.subr.bf16.mxu0 %v968
        %1795 = vmatpush1.bf16.msra.mxu0 %v967
        %1796 = vmatprep.subr.bf16.mxu0 %v964
        %1797 = vmatpush1.bf16.msra.mxu0 %v963
        %1798 = vmatprep.subr.bf16.mxu0 %v960
        %1799 = vmatpush1.bf16.msra.mxu0 %v959
        %1800 = vmatprep.subr.bf16.mxu0 %v956
        %1801 = vmatpush1.bf16.msra.mxu0 %v955
        %1802 = vmatprep.subr.bf16.mxu0 %v952
        %1803 = vmatpush1.bf16.msra.mxu0 %v951
        %1804 = vmatprep.subr.bf16.mxu0 %v948
        %1805 = vmatpush1.bf16.msra.mxu0 %v947
        %1806 = vmatprep.subr.bf16.mxu0 %v944
        %1807 = vmatpush1.bf16.msra.mxu0 %v943
        %1808 = vmatprep.subr.bf16.mxu0 %v940
        %1809 = vmatpush1.bf16.msra.mxu0 %v939
        %1810 = vmatprep.subr.bf16.mxu0 0
        %1811 = vmatpush2.bf16.msra.mxu0 0
        %1812 = vmatprep.subr.bf16.mxu0 0
        %1813 = vmatpush2.bf16.msra.mxu0 0
        %1814 = vmatprep.subr.bf16.mxu0 0
        %1815 = vmatpush2.bf16.msra.mxu0 0
        %1816 = vmatprep.subr.bf16.mxu0 0
        %1817 = vmatpush2.bf16.msra.mxu0 0
        %1818 = vmatprep.subr.bf16.mxu0 0
        %1819 = vmatpush2.bf16.msra.mxu0 0
        %1820 = vmatprep.subr.bf16.mxu0 0
        %1821 = vmatpush2.bf16.msra.mxu0 0
        %1822 = vmatprep.subr.bf16.mxu0 0
        %1823 = vmatpush2.bf16.msra.mxu0 0
        %1824 = vmatprep.subr.bf16.mxu0 0
        %1825 = vmatpush2.bf16.msra.mxu0 0
        %1826 = vmatprep.mubr.bf16.mxu0 0
        %1827 = vmatmul.mubr.bf16.gmra.mxu0 %v1745
        %v1828 = vpop.f32.mrf.mxu0
        %v1829 = vadd.f32 0.0, %v1828
        %v1830 = vpop.f32.mrf.mxu0
        %v1831 = vadd.f32 0.0, %v1830
        %v1832 = vpop.f32.mrf.mxu0
        %v1833 = vpop.f32.mrf.mxu0
        %1834 = vdwg.mxu0
        %v1835 = vadd.f32 %v1749, %v1788
        %v1836 = vadd.f32 %v1750, %v1790
        %v1837 = vadd.f32 %v1751, %v1829
        %v1838 = vadd.f32 %v1752, %v1831
        %v1839 = vadd.f32 %v1835, %v1091
        %v1840 = vadd.f32 %v1836, %v1095
        %v1841 = vadd.f32 %v1837, %v1099
        %v1842 = vadd.f32 %v1838, %v1103
        %v1843 = vxor.u32 %v1839, 2147483648
        %v1844 = vmul.f32 %v1843, 1.442695
        %v1845 = vpow.pop %v1844
        %v1846 = vadd.f32 %v1845, 1.0
        %v1847 = vrcp.pop %v1846
        %v1848 = vmul.f32 1.0, %v1847
        %v1849 = vxor.u32 %v1840, 2147483648
        %v1850 = vmul.f32 %v1849, 1.442695
        %v1851 = vpow.pop %v1850
        %v1852 = vadd.f32 %v1851, 1.0
        %v1853 = vrcp.pop %v1852
        %v1854 = vmul.f32 1.0, %v1853
        %v1855 = vtanh.pop %v1841
        %v1856 = vxor.u32 %v1842, 2147483648
        %v1857 = vmul.f32 %v1856, 1.442695
        %v1858 = vpow.pop %v1857
        %v1859 = vadd.f32 %v1858, 1.0
        %v1860 = vrcp.pop %v1859
        %v1861 = vmul.f32 1.0, %v1860
        %v1862 = vmul.f32 %v1854, %v1742
        %v1863 = vmul.f32 %v1848, %v1855
        %v1864 = vadd.f32 %v1862, %v1863
        %v1865 = vtanh.pop %v1864
        %v1866 = vmul.f32 %v1861, %v1865
        %v1867 = vpack.c.bf16 %v1866, %v1866
        %s1868 = scalar_lea.vmem [#allocation3], 24
        %1869 = vst [vmem:[%s1868] sm:$0xf] %v1867
        %s1870 = scalar_lea.vmem [#allocation2], 224
        %v1871 = vld [vmem:[%s1870] sm:$0xff]
        %v1872 = vld [vmem:[%s1870 + $0x8] sm:$0xff]
        %v1873 = vld [vmem:[%s1870 + $0x10] sm:$0xff]
        %v1874 = vld [vmem:[%s1870 + $0x18] sm:$0xff]
        %1875 = vmatprep.subr.bf16.mxu0 %v966
        %1876 = vmatpush1.bf16.msra.mxu0 %v965
        %1877 = vmatprep.subr.bf16.mxu0 %v962
        %1878 = vmatpush1.bf16.msra.mxu0 %v961
        %1879 = vmatprep.subr.bf16.mxu0 %v958
        %1880 = vmatpush1.bf16.msra.mxu0 %v957
        %1881 = vmatprep.subr.bf16.mxu0 %v954
        %1882 = vmatpush1.bf16.msra.mxu0 %v953
        %1883 = vmatprep.subr.bf16.mxu0 %v950
        %1884 = vmatpush1.bf16.msra.mxu0 %v949
        %1885 = vmatprep.subr.bf16.mxu0 %v946
        %1886 = vmatpush1.bf16.msra.mxu0 %v945
        %1887 = vmatprep.subr.bf16.mxu0 %v942
        %1888 = vmatpush1.bf16.msra.mxu0 %v941
        %1889 = vmatprep.subr.bf16.mxu0 %v938
        %1890 = vmatpush1.bf16.msra.mxu0 %v937
        %1891 = vmatprep.subr.bf16.mxu0 0
        %1892 = vmatpush2.bf16.msra.mxu0 0
        %1893 = vmatprep.subr.bf16.mxu0 0
        %1894 = vmatpush2.bf16.msra.mxu0 0
        %1895 = vmatprep.subr.bf16.mxu0 0
        %1896 = vmatpush2.bf16.msra.mxu0 0
        %1897 = vmatprep.subr.bf16.mxu0 0
        %1898 = vmatpush2.bf16.msra.mxu0 0
        %1899 = vmatprep.subr.bf16.mxu0 0
        %1900 = vmatpush2.bf16.msra.mxu0 0
        %1901 = vmatprep.subr.bf16.mxu0 0
        %1902 = vmatpush2.bf16.msra.mxu0 0
        %1903 = vmatprep.subr.bf16.mxu0 0
        %1904 = vmatpush2.bf16.msra.mxu0 0
        %1905 = vmatprep.subr.bf16.mxu0 0
        %1906 = vmatpush2.bf16.msra.mxu0 0
        %1907 = vmatprep.mubr.bf16.mxu0 0
        %1908 = vmatmul.mubr.bf16.gmra.mxu0 %v1867
        %v1909 = vpop.f32.mrf.mxu0
        %v1910 = vadd.f32 0.0, %v1909
        %v1911 = vpop.f32.mrf.mxu0
        %v1912 = vadd.f32 0.0, %v1911
        %v1913 = vpop.f32.mrf.mxu0
        %v1914 = vpop.f32.mrf.mxu0
        %1915 = vdwg.mxu0
        %1916 = vmatprep.subr.bf16.mxu0 %v968
        %1917 = vmatpush1.bf16.msra.mxu0 %v967
        %1918 = vmatprep.subr.bf16.mxu0 %v964
        %1919 = vmatpush1.bf16.msra.mxu0 %v963
        %1920 = vmatprep.subr.bf16.mxu0 %v960
        %1921 = vmatpush1.bf16.msra.mxu0 %v959
        %1922 = vmatprep.subr.bf16.mxu0 %v956
        %1923 = vmatpush1.bf16.msra.mxu0 %v955
        %1924 = vmatprep.subr.bf16.mxu0 %v952
        %1925 = vmatpush1.bf16.msra.mxu0 %v951
        %1926 = vmatprep.subr.bf16.mxu0 %v948
        %1927 = vmatpush1.bf16.msra.mxu0 %v947
        %1928 = vmatprep.subr.bf16.mxu0 %v944
        %1929 = vmatpush1.bf16.msra.mxu0 %v943
        %1930 = vmatprep.subr.bf16.mxu0 %v940
        %1931 = vmatpush1.bf16.msra.mxu0 %v939
        %1932 = vmatprep.subr.bf16.mxu0 0
        %1933 = vmatpush2.bf16.msra.mxu0 0
        %1934 = vmatprep.subr.bf16.mxu0 0
        %1935 = vmatpush2.bf16.msra.mxu0 0
        %1936 = vmatprep.subr.bf16.mxu0 0
        %1937 = vmatpush2.bf16.msra.mxu0 0
        %1938 = vmatprep.subr.bf16.mxu0 0
        %1939 = vmatpush2.bf16.msra.mxu0 0
        %1940 = vmatprep.subr.bf16.mxu0 0
        %1941 = vmatpush2.bf16.msra.mxu0 0
        %1942 = vmatprep.subr.bf16.mxu0 0
        %1943 = vmatpush2.bf16.msra.mxu0 0
        %1944 = vmatprep.subr.bf16.mxu0 0
        %1945 = vmatpush2.bf16.msra.mxu0 0
        %1946 = vmatprep.subr.bf16.mxu0 0
        %1947 = vmatpush2.bf16.msra.mxu0 0
        %1948 = vmatprep.mubr.bf16.mxu0 0
        %1949 = vmatmul.mubr.bf16.gmra.mxu0 %v1867
        %v1950 = vpop.f32.mrf.mxu0
        %v1951 = vadd.f32 0.0, %v1950
        %v1952 = vpop.f32.mrf.mxu0
        %v1953 = vadd.f32 0.0, %v1952
        %v1954 = vpop.f32.mrf.mxu0
        %v1955 = vpop.f32.mrf.mxu0
        %1956 = vdwg.mxu0
        %v1957 = vadd.f32 %v1871, %v1910
        %v1958 = vadd.f32 %v1872, %v1912
        %v1959 = vadd.f32 %v1873, %v1951
        %v1960 = vadd.f32 %v1874, %v1953
        %v1961 = vadd.f32 %v1957, %v1091
        %v1962 = vadd.f32 %v1958, %v1095
        %v1963 = vadd.f32 %v1959, %v1099
        %v1964 = vadd.f32 %v1960, %v1103
        %v1965 = vxor.u32 %v1961, 2147483648
        %v1966 = vmul.f32 %v1965, 1.442695
        %v1967 = vpow.pop %v1966
        %v1968 = vadd.f32 %v1967, 1.0
        %v1969 = vrcp.pop %v1968
        %v1970 = vmul.f32 1.0, %v1969
        %v1971 = vxor.u32 %v1962, 2147483648
        %v1972 = vmul.f32 %v1971, 1.442695
        %v1973 = vpow.pop %v1972
        %v1974 = vadd.f32 %v1973, 1.0
        %v1975 = vrcp.pop %v1974
        %v1976 = vmul.f32 1.0, %v1975
        %v1977 = vtanh.pop %v1963
        %v1978 = vxor.u32 %v1964, 2147483648
        %v1979 = vmul.f32 %v1978, 1.442695
        %v1980 = vpow.pop %v1979
        %v1981 = vadd.f32 %v1980, 1.0
        %v1982 = vrcp.pop %v1981
        %v1983 = vmul.f32 1.0, %v1982
        %v1984 = vmul.f32 %v1976, %v1864
        %v1985 = vmul.f32 %v1970, %v1977
        %v1986 = vadd.f32 %v1984, %v1985
        %v1987 = vtanh.pop %v1986
        %v1988 = vmul.f32 %v1983, %v1987
        %v1989 = vpack.c.bf16 %v1988, %v1988
        %s1990 = scalar_lea.vmem [#allocation3], 28
        %1991 = vst [vmem:[%s1990] sm:$0xf] %v1989
        %p1992 = scmp.eq.s32.totalorder %s31, 1
        // Predicated region
        $region65: #{tpu_custom_call.1} parent=43 // pred_check
          %p1993 = pneg %p1992
        $region66: #{tpu_custom_call.1} parent=43 // pred_check_branch
          %1995 = sbr.rel (%p1993) target = $region68
        $region67: #{tpu_custom_call.1} parent=43 // pred_region
          %v1996 = vld [vmem:[%s4] sm:$0x1]
          %v1998 = vlaneseq
          %v1999 = vshrl.u32 %v1998, 7
          %v2000 = vsub.s32 0, %v1999
          %v2001 = vrot.slane %v1996, %v2000
          %v2003 = vmul.f32 %v1988, %v2001
          %2004 = vadd.xlane.f32.xlu0 %v2003
          %v2005 = vpop.xlane.xlu0 %2004
          %v2006 = vld [vmem:[#allocation4] sm:$0x1]
          %v2008 = vlaneseq
          %v2009 = vshrl.u32 %v2008, 7
          %v2010 = vsub.s32 0, %v2009
          %v2011 = vrot.slane %v2006, %v2010
          %v2013 = vadd.f32 %v2005, %v2011
          %vm2014 = vcmask 7168
          %2015 = vst.msk [vmem:[%s380] sm:$0xff] %vm2014, %v2013
        $region68: #{tpu_custom_call.1} parent=43 // pred_fallthru
          _
        %p2016 = scmp.lt.s32.totalorder %s30, 0
        %s2017 = scalar_select %p2016, %s30, 0
        %s2018 = smul.addr %s2017, 8
        %s2019 = scalar_lea.vmem %s6, %s2018
        // Predicated region
        $region69: #{tpu_custom_call.1} parent=43 // pred_check
          %p2020 = pneg %p202
        $region70: #{tpu_custom_call.1} parent=43 // pred_check_branch
          %2022 = sbr.rel (%p2020) target = $region72
        $region71: #{tpu_custom_call.1} parent=43 // pred_region
          _
        $region72: #{tpu_custom_call.1} parent=43 // pred_fallthru
          _
        // Predicated region
        $region73: #{tpu_custom_call.1} parent=43 // pred_check
          %p2023 = pneg %p202
        $region74: #{tpu_custom_call.1} parent=43 // pred_check_branch
          %2025 = sbr.rel (%p2023) target = $region76
        $region75: #{tpu_custom_call.1} parent=43 // pred_region
          %p2026 = scmp.lt.s32.totalorder %s30, 0
          %s2027 = scalar_select %p2026, %s30, 0
          %s2028 = smul.addr %s2027, 8
          %s2029 = scalar_lea.vmem %s6, %s2028
        $region76: #{tpu_custom_call.1} parent=43 // pred_fallthru
          _
      $region44: #{tpu_custom_call.1} parent=5 // pred_fallthru
        _
      %p2030 = scmp.le.s32.totalorder 2, %s21
      // Predicated region
      $region77: #{tpu_custom_call.1} parent=5 // pred_check
        %p2031 = pneg %p2030
      $region78: #{tpu_custom_call.1} parent=5 // pred_check_branch
        %2033 = sbr.rel (%p2031) target = $region80
      $region79: #{tpu_custom_call.1} parent=5 // pred_region
        %s2034 = ssub.s32 %s21, 2
      $region80: #{tpu_custom_call.1} parent=5 // pred_fallthru
        _
    $region6: #{tpu_custom_call.1} parent=1 // loop_footer
      %s25 = sadd.s32 1, %s21
    $region7: #{tpu_custom_call.1} parent=1 // loop_footer_branch
      %20 = sbr.rel target = $region3
    $region8: #{tpu_custom_call.1} parent=1 // loop_exit
      _
    %2035 = vsyncpa [#allocation6], 1
    %s2036 = scalar_lea.sflag [#allocation6], 1
    %2037 = vsyncpa %s2036, 1
    %2038 = vsyncpa [#allocation8], 1
    %s2039 = scalar_lea.sflag [#allocation8], 1
    %2040 = vsyncpa %s2039, 1
    %2041 = vsyncpa [#allocation11], 1
    %s2042 = scalar_lea.sflag [#allocation11], 1
    %2043 = vsyncpa %s2042, 1

</llo_original>
